<compile_context>
chip_gen: v5e
topology: v5e:2x2
jax: 0.10.0
libtpu: 0.0.40
codegen_flags: <defaults>
</compile_context>

<pallas_src>
import jax
import jax.numpy as jnp
from jax.experimental import pallas as pl
from jax.experimental.pallas import tpu as pltpu


_INV_SQRT2 = 0.7071067811865476
_TAPS = tuple((dy, dx) for dy in range(3) for dx in range(3))


def _gelu_exact(x):
    # PyTorch nn.GELU() default = exact (erf-based) GELU; computed in f32.
    return 0.5 * x * (1.0 + jax.lax.erf(x * jnp.float32(_INV_SQRT2)))


# ------------------------------ fused kernel ------------------------------- #

def _make_fused_kernel(C, g, L, H, W, pad, compute_dtype):
    HW = H * W
    c_tot = C + L * g
    c_used = C + (L - 1) * g          # channels whose 3x3 taps are ever needed
    n_growth = L - 1

    def kernel(*refs):
        x_ref = refs[0]                       # (1, C, HW)   input image
        m_ref = refs[1]                       # (2, HW)      0/1 wraparound masks
        wbase_ref = refs[2]                   # (L*g, 9*C)   stacked base weights
        bstack_ref = refs[3]                  # (L*g, 1)     stacked biases (f32)
        growth_refs = refs[4:4 + n_growth]    # ((L-1-j)*g, 9*g) for j=0..L-2
        wf_ref = refs[4 + n_growth]           # (C, c_tot)   1x1 fusion weight
        bf_ref = refs[5 + n_growth]           # (C, 1)       fusion bias (f32)
        o_ref = refs[6 + n_growth]            # (1, C, HW)
        feat = refs[7 + n_growth]             # VMEM (c_tot, pad+HW+pad) cdtype
        patches = refs[8 + n_growth]          # VMEM (9*c_used, HW)      cdtype
        partial = refs[9 + n_growth]          # VMEM (L*g, HW)           f32

        # Zero halo columns only for rows whose taps will be read (the halo
        # provides the vertical half of SAME padding).
        zeros_pad = jnp.zeros((c_used, pad), compute_dtype)
        feat[0:c_used, 0:pad] = zeros_pad
        feat[0:c_used, pad + HW:pad + HW + pad] = zeros_pad

        x_f32 = x_ref[0].astype(jnp.float32)                  # (C, HW)
        feat[0:C, pad:pad + HW] = x_f32.astype(compute_dtype)

        mask_l = m_ref[0:1, :]    # 0 where x == 0      (kills row wraparound)
        mask_r = m_ref[1:2, :]    # 0 where x == W - 1

        def emit_taps(fs, bsize, ps):
            # Append the 9 shifted+masked views of feat rows [fs, fs+bsize)
            # into patches rows [ps, ps+9*bsize), tap-major within the block
            # (matches the host-side (O, ky, kx, I) weight repack).
            for t, (dy, dx) in enumerate(_TAPS):
                off = (dy - 1) * W + (dx - 1)
                blk = feat[fs:fs + bsize, pad + off:pad + off + HW]
                if dx == 0:
                    blk = blk * mask_l
                elif dx == 2:
                    blk = blk * mask_r
                patches[ps + t * bsize:ps + (t + 1) * bsize, :] = blk

        # --- base-channel taps: extracted exactly once ----------------------
        emit_taps(0, C, 0)

        # --- one stacked matmul: every layer's base-C contribution at once --
        partial[...] = (
            jnp.dot(wbase_ref[...], patches[0:9 * C, :],
                    preferred_element_type=jnp.float32)
            + bstack_ref[...].astype(jnp.float32))

        # --- dense layers ----------------------------------------------------
        for i in range(L):
            y = _gelu_exact(partial[i * g:(i + 1) * g, :])     # (g, HW) f32
            # TODO(synk): Dropout2d is identity in eval mode only.
            fs = C + i * g
            feat[fs:fs + g, pad:pad + HW] = y.astype(compute_dtype)
            if i < L - 1:
                ps = 9 * fs
                emit_taps(fs, g, ps)
                # This block's contribution to every *future* layer, stacked.
                contrib = jnp.dot(growth_refs[i][...],
                                  patches[ps:ps + 9 * g, :],
                                  preferred_element_type=jnp.float32)
                partial[(i + 1) * g:L * g, :] = (
                    partial[(i + 1) * g:L * g, :] + contrib)

        # --- 1x1 local fusion over all Ctot features + global residual ------
        feats_all = feat[:, pad:pad + HW]                       # (c_tot, HW)
        out = jnp.dot(wf_ref[...], feats_all,
                      preferred_element_type=jnp.float32)       # (C, HW) f32
        out = out + bf_ref[...].astype(jnp.float32) + x_f32
        o_ref[...] = out.reshape(1, C, HW).astype(o_ref.dtype)

    return kernel


# ------------------------------ host wrapper -------------------------------- #

def _pack_conv_weight(w):
    """(O, I, 3, 3) OIHW  ->  (O, 9*I), tap-major then channel-within-tap."""
    o, i = w.shape[0], w.shape[1]
    return jnp.transpose(w, (0, 2, 3, 1)).reshape(o, 9 * i)


def residual_dense_block_forward(x_nchw, layer_params, fusion_w, fusion_b,
                                 *, compute_dtype=jnp.bfloat16):
    """Fused forward.  x_nchw: (N,C,H,W); layer_params: [(w OIHW, b (g,))]*L;
    fusion_w: (C, C + L*g); fusion_b: (C,)."""
    N, C, H, W = x_nchw.shape
    L = len(layer_params)
    g = layer_params[0][0].shape[0]
    c_tot = C + L * g
    c_used = C + (L - 1) * g
    HW = H * W

    # Full-tile (unmasked) stores need aligned shapes.
    # TODO(synk): pad host-side instead of asserting for odd configs.
    assert C % 8 == 0 and g % 8 == 0, "channels/growth_rate must be multiples of 8"
    assert HW % 128 == 0, "H*W must be a multiple of 128"

    # Lane-aligned halo, wide enough that every 3x3 tap is a static lane slice.
    pad = -(-(W + 1) // 128) * 128

    cdtype = compute_dtype
    x_flat = x_nchw.reshape(N, C, HW)

    # 0/1 column masks removing row-wraparound for the x-1 / x+1 taps.
    xc = jnp.arange(HW, dtype=jnp.int32) % W
    mask = jnp.stack([(xc != 0), (xc != W - 1)]).astype(cdtype)        # (2, HW)

    # Host-side weight repack (channel-block-major patches layout, tap-major
    # within each block), stacked for the base / per-growth-block matmuls.
    wbase = jnp.concatenate(
        [_pack_conv_weight(w[:, :C]) for (w, _) in layer_params], axis=0
    ).astype(cdtype)                                                   # (L*g, 9C)
    bstack = jnp.concatenate(
        [b for (_, b) in layer_params], axis=0).reshape(L * g, 1).astype(jnp.float32)
    growth_ws = []
    for j in range(L - 1):
        blk = jnp.concatenate(
            [_pack_conv_weight(layer_params[i][0][:, C + j * g:C + (j + 1) * g])
             for i in range(j + 1, L)], axis=0)
        growth_ws.append(blk.astype(cdtype))                           # ((L-1-j)*g, 9g)
    wf = fusion_w.astype(cdtype)
    bf = fusion_b.reshape(C, 1).astype(jnp.float32)

    inputs = [x_flat, mask, wbase, bstack, *growth_ws, wf, bf]
    in_specs = [
        pl.BlockSpec((1, C, HW), lambda n: (n, 0, 0)),
        pl.BlockSpec((2, HW), lambda n: (0, 0)),
        pl.BlockSpec((L * g, 9 * C), lambda n: (0, 0)),
        pl.BlockSpec((L * g, 1), lambda n: (0, 0)),
    ]
    for j in range(L - 1):
        in_specs.append(pl.BlockSpec(((L - 1 - j) * g, 9 * g), lambda n: (0, 0)))
    in_specs += [
        pl.BlockSpec((C, c_tot), lambda n: (0, 0)),
        pl.BlockSpec((C, 1), lambda n: (0, 0)),
    ]

    scratch_shapes = [
        pltpu.VMEM((c_tot, pad + HW + pad), cdtype),   # halo'd feature stack
        pltpu.VMEM((9 * c_used, HW), cdtype),          # persistent im2col patches
        pltpu.VMEM((L * g, HW), jnp.float32),          # pre-activation accumulator
    ]

    # vmem limit derived from the actual buffers (+ live temporaries + headroom).
    io_item = jnp.dtype(x_nchw.dtype).itemsize
    cd_item = jnp.dtype(cdtype).itemsize
    block_bytes = 2 * C * HW * io_item                              # x + out blocks
    const_bytes = sum(int(a.size) * jnp.dtype(a.dtype).itemsize for a in inputs[1:])
    scratch_bytes = (c_tot * (pad + HW + pad) * cd_item
                     + 9 * c_used * HW * cd_item
                     + L * g * HW * 4)
    temp_bytes = 4 * (L * g + C) * HW * 4                           # dot/GELU temps
    vmem_bytes = 2 * (block_bytes + const_bytes) + scratch_bytes + temp_bytes + (4 << 20)
    vmem_bytes = int(min(max(vmem_bytes, 16 << 20), 64 << 20))      # valid on v5e/v6e/v7x

    kernel = _make_fused_kernel(C, g, L, H, W, pad, cdtype)
    out_flat = pl.pallas_call(
        kernel,
        out_shape=jax.ShapeDtypeStruct((N, C, HW), x_nchw.dtype),
        grid=(N,),
        in_specs=in_specs,
        out_specs=pl.BlockSpec((1, C, HW), lambda n: (n, 0, 0)),
        scratch_shapes=scratch_shapes,
        compiler_params=pltpu.CompilerParams(
            dimension_semantics=("parallel",),
            vmem_limit_bytes=vmem_bytes,
        ),
    )(*inputs)
    return out_flat.reshape(N, C, H, W)


# ------------------------------- Module port -------------------------------- #

class ResidualDenseBlockPallas:
    def __init__(self, channels: int, growth_rate: int, num_layers: int = 4,
                 dropout_rate: float = 0.05, key=None, mxu_bf16: bool = True):
        if key is None:
            key = jax.random.PRNGKey(0)
        self.channels = channels
        self.growth_rate = growth_rate
        self.num_layers = num_layers
        # bf16 MXU operands + bf16 feature/patch scratch (f32 accumulate) by
        # default; mxu_bf16=False gives exact f32 numerics.
        self.compute_dtype = jnp.bfloat16 if mxu_bf16 else jnp.float32
        keys = jax.random.split(key, 2 * num_layers + 2)
        self.layer_params = []
        for i in range(num_layers):
            in_ch = channels + i * growth_rate
            w = 0.1 * jax.random.normal(
                keys[2 * i], (growth_rate, in_ch, 3, 3), jnp.float32)   # OIHW
            b = 0.01 * jax.random.normal(
                keys[2 * i + 1], (growth_rate,), jnp.float32)
            self.layer_params.append((w, b))
        c_tot = channels + num_layers * growth_rate
        self.fusion_w = 0.1 * jax.random.normal(
            keys[-2], (channels, c_tot), jnp.float32)
        self.fusion_b = 0.01 * jax.random.normal(
            keys[-1], (channels,), jnp.float32)

    def __call__(self, x_nchw):
        return residual_dense_block_forward(
            x_nchw, self.layer_params, self.fusion_w, self.fusion_b,
            compute_dtype=self.compute_dtype)


# -------------------------- pure-JAX reference ------------------------------ #

def _reference_forward(block: ResidualDenseBlockPallas, x_nchw):
    dn = ("NCHW", "OIHW", "NCHW")
    features = [x_nchw.astype(jnp.float32)]
    for (w, b) in block.layer_params:
        inp = jnp.concatenate(features, axis=1)
        y = jax.lax.conv_general_dilated(inp, w, (1, 1), "SAME",
                                         dimension_numbers=dn)
        y = jax.nn.gelu(y + b[None, :, None, None], approximate=False)
        features.append(y)
    feat = jnp.concatenate(features, axis=1)
    fused = jnp.einsum("ck,nkhw->nchw", block.fusion_w, feat)
    fused = fused + block.fusion_b[None, :, None, None]
    return (fused + x_nchw).astype(x_nchw.dtype)


if __name__ == "__main__":
    key = jax.random.PRNGKey(0)
    k_x, k_p = jax.random.split(key)

    N, C, H, W = 2, 8, 16, 16
    growth_rate, num_layers = 8, 4
    x = jax.random.normal(k_x, (N, C, H, W), jnp.float32)

    # Default block: bf16 MXU operands + bf16 scratch, f32 accumulate.
    block_bf16 = ResidualDenseBlockPallas(C, growth_rate, num_layers, key=k_p)
    out_bf16 = jax.block_until_ready(block_bf16(x))
    ref = jax.block_until_ready(_reference_forward(block_bf16, x))

    assert out_bf16.shape == (N, C, H, W)
    assert out_bf16.dtype == x.dtype
    # bf16 operands round to ~2^-8 relative before the MXU, so use a
    # bf16-appropriate tolerance here; exact numerics are checked below.
    assert jnp.allclose(out_bf16, ref, atol=1e-1, rtol=1e-1), (
        float(jnp.max(jnp.abs(out_bf16 - ref))))

    # Same kernel in exact f32 mode must match the f32 reference tightly.
    block_f32 = ResidualDenseBlockPallas(C, growth_rate, num_layers, key=k_p,
                                         mxu_bf16=False)
    out_f32 = jax.block_until_ready(block_f32(x))
    assert jnp.allclose(out_f32, ref, atol=1e-4, rtol=1e-4), (
        float(jnp.max(jnp.abs(out_f32 - ref))))

    print("KERNEL_OK")
</pallas_src>

<mosaic_0001>
module attributes {stable_mosaic.version = 11 : i64} {
  func.func @kernel(%arg0: i32, %arg1: memref<1x8x256xf32, #tpu.memory_space<vmem>>, %arg2: memref<2x256xbf16, #tpu.memory_space<vmem>>, %arg3: memref<32x72xbf16, #tpu.memory_space<vmem>>, %arg4: memref<32x1xf32, #tpu.memory_space<vmem>>, %arg5: memref<24x72xbf16, #tpu.memory_space<vmem>>, %arg6: memref<16x72xbf16, #tpu.memory_space<vmem>>, %arg7: memref<8x72xbf16, #tpu.memory_space<vmem>>, %arg8: memref<8x40xbf16, #tpu.memory_space<vmem>>, %arg9: memref<8x1xf32, #tpu.memory_space<vmem>>, %arg10: memref<1x8x256xf32, #tpu.memory_space<vmem>>, %arg11: memref<40x512xbf16, #tpu.memory_space<vmem>>, %arg12: memref<288x256xbf16, #tpu.memory_space<vmem>>, %arg13: memref<32x256xf32, #tpu.memory_space<vmem>>) attributes {dimension_semantics = [#tpu.dimension_semantics<parallel>], iteration_bounds = array<i64: 2>, scalar_prefetch = 0 : i64, scratch_operands = 3 : i64, tpu.core_type = #tpu.core_type<tc>, window_params = [{transform_indices = @transform_0, window_bounds = array<i64: 1, 8, 256>}, {pipeline_mode = #tpu.pipeline_mode<synchronous>, transform_indices = @transform_1, window_bounds = array<i64: 2, 256>}, {pipeline_mode = #tpu.pipeline_mode<synchronous>, transform_indices = @transform_2, window_bounds = array<i64: 32, 72>}, {pipeline_mode = #tpu.pipeline_mode<synchronous>, transform_indices = @transform_3, window_bounds = array<i64: 32, 1>}, {pipeline_mode = #tpu.pipeline_mode<synchronous>, transform_indices = @transform_4, window_bounds = array<i64: 24, 72>}, {pipeline_mode = #tpu.pipeline_mode<synchronous>, transform_indices = @transform_5, window_bounds = array<i64: 16, 72>}, {pipeline_mode = #tpu.pipeline_mode<synchronous>, transform_indices = @transform_6, window_bounds = array<i64: 8, 72>}, {pipeline_mode = #tpu.pipeline_mode<synchronous>, transform_indices = @transform_7, window_bounds = array<i64: 8, 40>}, {pipeline_mode = #tpu.pipeline_mode<synchronous>, transform_indices = @transform_8, window_bounds = array<i64: 8, 1>}, {transform_indices = @transform_9, window_bounds = array<i64: 1, 8, 256>}]} {
    %cst = arith.constant 0.000000e+00 : bf16
    %0 = vector.broadcast %cst : bf16 to vector<32x128xbf16>
    %c0 = arith.constant 0 : index
    %c0_0 = arith.constant 0 : index
    %1 = vector.load %arg11[%c0, %c0_0] : memref<40x512xbf16, #tpu.memory_space<vmem>>, vector<32x128xbf16>
    tpu.vector_store %arg11[%c0, %c0_0], %0 {strides = array<i32>} : memref<40x512xbf16, #tpu.memory_space<vmem>>, vector<32x128xbf16>,
    %c0_1 = arith.constant 0 : index
    %c384 = arith.constant 384 : index
    %2 = vector.load %arg11[%c0_1, %c384] : memref<40x512xbf16, #tpu.memory_space<vmem>>, vector<32x128xbf16>
    tpu.vector_store %arg11[%c0_1, %c384], %0 {strides = array<i32>} : memref<40x512xbf16, #tpu.memory_space<vmem>>, vector<32x128xbf16>,
    %c0_2 = arith.constant 0 : index
    %c0_3 = arith.constant 0 : index
    %c0_4 = arith.constant 0 : index
    %3 = vector.load %arg1[%c0_2, %c0_3, %c0_4] : memref<1x8x256xf32, #tpu.memory_space<vmem>>, vector<1x8x256xf32>
    %4 = vector.shape_cast %3 : vector<1x8x256xf32> to vector<8x256xf32>
    %5 = arith.truncf %4 : vector<8x256xf32> to vector<8x256xbf16>
    %c0_5 = arith.constant 0 : index
    %c128 = arith.constant 128 : index
    %6 = vector.load %arg11[%c0_5, %c128] : memref<40x512xbf16, #tpu.memory_space<vmem>>, vector<8x256xbf16>
    tpu.vector_store %arg11[%c0_5, %c128], %5 {strides = array<i32>} : memref<40x512xbf16, #tpu.memory_space<vmem>>, vector<8x256xbf16>,
    %c0_6 = arith.constant 0 : index
    %c0_7 = arith.constant 0 : index
    %7 = vector.load %arg2[%c0_6, %c0_7] : memref<2x256xbf16, #tpu.memory_space<vmem>>, vector<1x256xbf16>
    %c1 = arith.constant 1 : index
    %c0_8 = arith.constant 0 : index
    %8 = vector.load %arg2[%c1, %c0_8] : memref<2x256xbf16, #tpu.memory_space<vmem>>, vector<1x256xbf16>
    %c0_9 = arith.constant 0 : index
    %c111 = arith.constant 111 : index
    %9 = vector.load %arg11[%c0_9, %c111] : memref<40x512xbf16, #tpu.memory_space<vmem>>, vector<8x256xbf16>
    %10 = vector.broadcast %7 : vector<1x256xbf16> to vector<8x256xbf16>
    %11 = arith.mulf %9, %10 : vector<8x256xbf16>
    %c0_10 = arith.constant 0 : index
    %c0_11 = arith.constant 0 : index
    %12 = vector.load %arg12[%c0_10, %c0_11] : memref<288x256xbf16, #tpu.memory_space<vmem>>, vector<8x256xbf16>
    tpu.vector_store %arg12[%c0_10, %c0_11], %11 {strides = array<i32>} : memref<288x256xbf16, #tpu.memory_space<vmem>>, vector<8x256xbf16>,
    %c0_12 = arith.constant 0 : index
    %c112 = arith.constant 112 : index
    %13 = vector.load %arg11[%c0_12, %c112] : memref<40x512xbf16, #tpu.memory_space<vmem>>, vector<8x256xbf16>
    %c8 = arith.constant 8 : index
    %c0_13 = arith.constant 0 : index
    %14 = vector.load %arg12[%c8, %c0_13] : memref<288x256xbf16, #tpu.memory_space<vmem>>, vector<8x256xbf16>
    tpu.vector_store %arg12[%c8, %c0_13], %13 {strides = array<i32>} : memref<288x256xbf16, #tpu.memory_space<vmem>>, vector<8x256xbf16>,
    %c0_14 = arith.constant 0 : index
    %c113 = arith.constant 113 : index
    %15 = vector.load %arg11[%c0_14, %c113] : memref<40x512xbf16, #tpu.memory_space<vmem>>, vector<8x256xbf16>
    %16 = vector.broadcast %8 : vector<1x256xbf16> to vector<8x256xbf16>
    %17 = arith.mulf %15, %16 : vector<8x256xbf16>
    %c16 = arith.constant 16 : index
    %c0_15 = arith.constant 0 : index
    %18 = vector.load %arg12[%c16, %c0_15] : memref<288x256xbf16, #tpu.memory_space<vmem>>, vector<8x256xbf16>
    tpu.vector_store %arg12[%c16, %c0_15], %17 {strides = array<i32>} : memref<288x256xbf16, #tpu.memory_space<vmem>>, vector<8x256xbf16>,
    %c0_16 = arith.constant 0 : index
    %c127 = arith.constant 127 : index
    %19 = vector.load %arg11[%c0_16, %c127] : memref<40x512xbf16, #tpu.memory_space<vmem>>, vector<8x256xbf16>
    %20 = vector.broadcast %7 : vector<1x256xbf16> to vector<8x256xbf16>
    %21 = arith.mulf %19, %20 : vector<8x256xbf16>
    %c24 = arith.constant 24 : index
    %c0_17 = arith.constant 0 : index
    %22 = vector.load %arg12[%c24, %c0_17] : memref<288x256xbf16, #tpu.memory_space<vmem>>, vector<8x256xbf16>
    tpu.vector_store %arg12[%c24, %c0_17], %21 {strides = array<i32>} : memref<288x256xbf16, #tpu.memory_space<vmem>>, vector<8x256xbf16>,
    %c0_18 = arith.constant 0 : index
    %c128_19 = arith.constant 128 : index
    %23 = vector.load %arg11[%c0_18, %c128_19] : memref<40x512xbf16, #tpu.memory_space<vmem>>, vector<8x256xbf16>
    %c32 = arith.constant 32 : index
    %c0_20 = arith.constant 0 : index
    %24 = vector.load %arg12[%c32, %c0_20] : memref<288x256xbf16, #tpu.memory_space<vmem>>, vector<8x256xbf16>
    tpu.vector_store %arg12[%c32, %c0_20], %23 {strides = array<i32>} : memref<288x256xbf16, #tpu.memory_space<vmem>>, vector<8x256xbf16>,
    %c0_21 = arith.constant 0 : index
    %c129 = arith.constant 129 : index
    %25 = vector.load %arg11[%c0_21, %c129] : memref<40x512xbf16, #tpu.memory_space<vmem>>, vector<8x256xbf16>
    %26 = vector.broadcast %8 : vector<1x256xbf16> to vector<8x256xbf16>
    %27 = arith.mulf %25, %26 : vector<8x256xbf16>
    %c40 = arith.constant 40 : index
    %c0_22 = arith.constant 0 : index
    %28 = vector.load %arg12[%c40, %c0_22] : memref<288x256xbf16, #tpu.memory_space<vmem>>, vector<8x256xbf16>
    tpu.vector_store %arg12[%c40, %c0_22], %27 {strides = array<i32>} : memref<288x256xbf16, #tpu.memory_space<vmem>>, vector<8x256xbf16>,
    %c0_23 = arith.constant 0 : index
    %c143 = arith.constant 143 : index
    %29 = vector.load %arg11[%c0_23, %c143] : memref<40x512xbf16, #tpu.memory_space<vmem>>, vector<8x256xbf16>
    %30 = vector.broadcast %7 : vector<1x256xbf16> to vector<8x256xbf16>
    %31 = arith.mulf %29, %30 : vector<8x256xbf16>
    %c48 = arith.constant 48 : index
    %c0_24 = arith.constant 0 : index
    %32 = vector.load %arg12[%c48, %c0_24] : memref<288x256xbf16, #tpu.memory_space<vmem>>, vector<8x256xbf16>
    tpu.vector_store %arg12[%c48, %c0_24], %31 {strides = array<i32>} : memref<288x256xbf16, #tpu.memory_space<vmem>>, vector<8x256xbf16>,
    %c0_25 = arith.constant 0 : index
    %c144 = arith.constant 144 : index
    %33 = vector.load %arg11[%c0_25, %c144] : memref<40x512xbf16, #tpu.memory_space<vmem>>, vector<8x256xbf16>
    %c56 = arith.constant 56 : index
    %c0_26 = arith.constant 0 : index
    %34 = vector.load %arg12[%c56, %c0_26] : memref<288x256xbf16, #tpu.memory_space<vmem>>, vector<8x256xbf16>
    tpu.vector_store %arg12[%c56, %c0_26], %33 {strides = array<i32>} : memref<288x256xbf16, #tpu.memory_space<vmem>>, vector<8x256xbf16>,
    %c0_27 = arith.constant 0 : index
    %c145 = arith.constant 145 : index
    %35 = vector.load %arg11[%c0_27, %c145] : memref<40x512xbf16, #tpu.memory_space<vmem>>, vector<8x256xbf16>
    %36 = vector.broadcast %8 : vector<1x256xbf16> to vector<8x256xbf16>
    %37 = arith.mulf %35, %36 : vector<8x256xbf16>
    %c64 = arith.constant 64 : index
    %c0_28 = arith.constant 0 : index
    %38 = vector.load %arg12[%c64, %c0_28] : memref<288x256xbf16, #tpu.memory_space<vmem>>, vector<8x256xbf16>
    tpu.vector_store %arg12[%c64, %c0_28], %37 {strides = array<i32>} : memref<288x256xbf16, #tpu.memory_space<vmem>>, vector<8x256xbf16>,
    %c0_29 = arith.constant 0 : index
    %c0_30 = arith.constant 0 : index
    %39 = vector.load %arg3[%c0_29, %c0_30] : memref<32x72xbf16, #tpu.memory_space<vmem>>, vector<32x72xbf16>
    %c0_31 = arith.constant 0 : index
    %c0_32 = arith.constant 0 : index
    %40 = vector.load %arg12[%c0_31, %c0_32] : memref<288x256xbf16, #tpu.memory_space<vmem>>, vector<72x256xbf16>
    %cst_33 = arith.constant dense<0.000000e+00> : vector<32x256xf32>
    %41 = tpu.matmul %39, %40, %cst_33 {dimension_numbers = #tpu.dot_dimension_numbers<[1], [0], [0], [1], [0, 0, 1, 1], [], []>} : vector<32x72xbf16>, vector<72x256xbf16>, vector<32x256xf32> -> vector<32x256xf32>
    %c0_34 = arith.constant 0 : index
    %c0_35 = arith.constant 0 : index
    %42 = vector.load %arg4[%c0_34, %c0_35] : memref<32x1xf32, #tpu.memory_space<vmem>>, vector<32x1xf32>
    %43 = vector.broadcast %42 : vector<32x1xf32> to vector<32x256xf32>
    %44 = arith.addf %41, %43 : vector<32x256xf32>
    %c0_36 = arith.constant 0 : index
    %c0_37 = arith.constant 0 : index
    %45 = vector.load %arg13[%c0_36, %c0_37] : memref<32x256xf32, #tpu.memory_space<vmem>>, vector<32x256xf32>
    tpu.vector_store %arg13[%c0_36, %c0_37], %44 {strides = array<i32>} : memref<32x256xf32, #tpu.memory_space<vmem>>, vector<32x256xf32>,
    %c0_38 = arith.constant 0 : index
    %c0_39 = arith.constant 0 : index
    %46 = vector.load %arg13[%c0_38, %c0_39] : memref<32x256xf32, #tpu.memory_space<vmem>>, vector<8x256xf32>
    %cst_40 = arith.constant 5.000000e-01 : f32
    %47 = vector.broadcast %cst_40 : f32 to vector<8x256xf32>
    %48 = arith.mulf %47, %46 : vector<8x256xf32>
    %cst_41 = arith.constant 0.707106769 : f32
    %49 = vector.broadcast %cst_41 : f32 to vector<8x256xf32>
    %50 = arith.mulf %46, %49 : vector<8x256xf32>
    %51 = math.erf %50 : vector<8x256xf32>
    %cst_42 = arith.constant 1.000000e+00 : f32
    %52 = vector.broadcast %cst_42 : f32 to vector<8x256xf32>
    %53 = arith.addf %52, %51 : vector<8x256xf32>
    %54 = arith.mulf %48, %53 : vector<8x256xf32>
    %55 = arith.truncf %54 : vector<8x256xf32> to vector<8x256xbf16>
    %c8_43 = arith.constant 8 : index
    %c128_44 = arith.constant 128 : index
    %56 = vector.load %arg11[%c8_43, %c128_44] : memref<40x512xbf16, #tpu.memory_space<vmem>>, vector<8x256xbf16>
    tpu.vector_store %arg11[%c8_43, %c128_44], %55 {strides = array<i32>} : memref<40x512xbf16, #tpu.memory_space<vmem>>, vector<8x256xbf16>,
    %c8_45 = arith.constant 8 : index
    %c111_46 = arith.constant 111 : index
    %57 = vector.load %arg11[%c8_45, %c111_46] : memref<40x512xbf16, #tpu.memory_space<vmem>>, vector<8x256xbf16>
    %58 = vector.broadcast %7 : vector<1x256xbf16> to vector<8x256xbf16>
    %59 = arith.mulf %57, %58 : vector<8x256xbf16>
    %c72 = arith.constant 72 : index
    %c0_47 = arith.constant 0 : index
    %60 = vector.load %arg12[%c72, %c0_47] : memref<288x256xbf16, #tpu.memory_space<vmem>>, vector<8x256xbf16>
    tpu.vector_store %arg12[%c72, %c0_47], %59 {strides = array<i32>} : memref<288x256xbf16, #tpu.memory_space<vmem>>, vector<8x256xbf16>,
    %c8_48 = arith.constant 8 : index
    %c112_49 = arith.constant 112 : index
    %61 = vector.load %arg11[%c8_48, %c112_49] : memref<40x512xbf16, #tpu.memory_space<vmem>>, vector<8x256xbf16>
    %c80 = arith.constant 80 : index
    %c0_50 = arith.constant 0 : index
    %62 = vector.load %arg12[%c80, %c0_50] : memref<288x256xbf16, #tpu.memory_space<vmem>>, vector<8x256xbf16>
    tpu.vector_store %arg12[%c80, %c0_50], %61 {strides = array<i32>} : memref<288x256xbf16, #tpu.memory_space<vmem>>, vector<8x256xbf16>,
    %c8_51 = arith.constant 8 : index
    %c113_52 = arith.constant 113 : index
    %63 = vector.load %arg11[%c8_51, %c113_52] : memref<40x512xbf16, #tpu.memory_space<vmem>>, vector<8x256xbf16>
    %64 = vector.broadcast %8 : vector<1x256xbf16> to vector<8x256xbf16>
    %65 = arith.mulf %63, %64 : vector<8x256xbf16>
    %c88 = arith.constant 88 : index
    %c0_53 = arith.constant 0 : index
    %66 = vector.load %arg12[%c88, %c0_53] : memref<288x256xbf16, #tpu.memory_space<vmem>>, vector<8x256xbf16>
    tpu.vector_store %arg12[%c88, %c0_53], %65 {strides = array<i32>} : memref<288x256xbf16, #tpu.memory_space<vmem>>, vector<8x256xbf16>,
    %c8_54 = arith.constant 8 : index
    %c127_55 = arith.constant 127 : index
    %67 = vector.load %arg11[%c8_54, %c127_55] : memref<40x512xbf16, #tpu.memory_space<vmem>>, vector<8x256xbf16>
    %68 = vector.broadcast %7 : vector<1x256xbf16> to vector<8x256xbf16>
    %69 = arith.mulf %67, %68 : vector<8x256xbf16>
    %c96 = arith.constant 96 : index
    %c0_56 = arith.constant 0 : index
    %70 = vector.load %arg12[%c96, %c0_56] : memref<288x256xbf16, #tpu.memory_space<vmem>>, vector<8x256xbf16>
    tpu.vector_store %arg12[%c96, %c0_56], %69 {strides = array<i32>} : memref<288x256xbf16, #tpu.memory_space<vmem>>, vector<8x256xbf16>,
    %c8_57 = arith.constant 8 : index
    %c128_58 = arith.constant 128 : index
    %71 = vector.load %arg11[%c8_57, %c128_58] : memref<40x512xbf16, #tpu.memory_space<vmem>>, vector<8x256xbf16>
    %c104 = arith.constant 104 : index
    %c0_59 = arith.constant 0 : index
    %72 = vector.load %arg12[%c104, %c0_59] : memref<288x256xbf16, #tpu.memory_space<vmem>>, vector<8x256xbf16>
    tpu.vector_store %arg12[%c104, %c0_59], %71 {strides = array<i32>} : memref<288x256xbf16, #tpu.memory_space<vmem>>, vector<8x256xbf16>,
    %c8_60 = arith.constant 8 : index
    %c129_61 = arith.constant 129 : index
    %73 = vector.load %arg11[%c8_60, %c129_61] : memref<40x512xbf16, #tpu.memory_space<vmem>>, vector<8x256xbf16>
    %74 = vector.broadcast %8 : vector<1x256xbf16> to vector<8x256xbf16>
    %75 = arith.mulf %73, %74 : vector<8x256xbf16>
    %c112_62 = arith.constant 112 : index
    %c0_63 = arith.constant 0 : index
    %76 = vector.load %arg12[%c112_62, %c0_63] : memref<288x256xbf16, #tpu.memory_space<vmem>>, vector<8x256xbf16>
    tpu.vector_store %arg12[%c112_62, %c0_63], %75 {strides = array<i32>} : memref<288x256xbf16, #tpu.memory_space<vmem>>, vector<8x256xbf16>,
    %c8_64 = arith.constant 8 : index
    %c143_65 = arith.constant 143 : index
    %77 = vector.load %arg11[%c8_64, %c143_65] : memref<40x512xbf16, #tpu.memory_space<vmem>>, vector<8x256xbf16>
    %78 = vector.broadcast %7 : vector<1x256xbf16> to vector<8x256xbf16>
    %79 = arith.mulf %77, %78 : vector<8x256xbf16>
    %c120 = arith.constant 120 : index
    %c0_66 = arith.constant 0 : index
    %80 = vector.load %arg12[%c120, %c0_66] : memref<288x256xbf16, #tpu.memory_space<vmem>>, vector<8x256xbf16>
    tpu.vector_store %arg12[%c120, %c0_66], %79 {strides = array<i32>} : memref<288x256xbf16, #tpu.memory_space<vmem>>, vector<8x256xbf16>,
    %c8_67 = arith.constant 8 : index
    %c144_68 = arith.constant 144 : index
    %81 = vector.load %arg11[%c8_67, %c144_68] : memref<40x512xbf16, #tpu.memory_space<vmem>>, vector<8x256xbf16>
    %c128_69 = arith.constant 128 : index
    %c0_70 = arith.constant 0 : index
    %82 = vector.load %arg12[%c128_69, %c0_70] : memref<288x256xbf16, #tpu.memory_space<vmem>>, vector<8x256xbf16>
    tpu.vector_store %arg12[%c128_69, %c0_70], %81 {strides = array<i32>} : memref<288x256xbf16, #tpu.memory_space<vmem>>, vector<8x256xbf16>,
    %c8_71 = arith.constant 8 : index
    %c145_72 = arith.constant 145 : index
    %83 = vector.load %arg11[%c8_71, %c145_72] : memref<40x512xbf16, #tpu.memory_space<vmem>>, vector<8x256xbf16>
    %84 = vector.broadcast %8 : vector<1x256xbf16> to vector<8x256xbf16>
    %85 = arith.mulf %83, %84 : vector<8x256xbf16>
    %c136 = arith.constant 136 : index
    %c0_73 = arith.constant 0 : index
    %86 = vector.load %arg12[%c136, %c0_73] : memref<288x256xbf16, #tpu.memory_space<vmem>>, vector<8x256xbf16>
    tpu.vector_store %arg12[%c136, %c0_73], %85 {strides = array<i32>} : memref<288x256xbf16, #tpu.memory_space<vmem>>, vector<8x256xbf16>,
    %c0_74 = arith.constant 0 : index
    %c0_75 = arith.constant 0 : index
    %87 = vector.load %arg5[%c0_74, %c0_75] : memref<24x72xbf16, #tpu.memory_space<vmem>>, vector<24x72xbf16>
    %c72_76 = arith.constant 72 : index
    %c0_77 = arith.constant 0 : index
    %88 = vector.load %arg12[%c72_76, %c0_77] : memref<288x256xbf16, #tpu.memory_space<vmem>>, vector<72x256xbf16>
    %cst_78 = arith.constant dense<0.000000e+00> : vector<24x256xf32>
    %89 = tpu.matmul %87, %88, %cst_78 {dimension_numbers = #tpu.dot_dimension_numbers<[1], [0], [0], [1], [0, 0, 1, 1], [], []>} : vector<24x72xbf16>, vector<72x256xbf16>, vector<24x256xf32> -> vector<24x256xf32>
    %c8_79 = arith.constant 8 : index
    %c0_80 = arith.constant 0 : index
    %90 = vector.load %arg13[%c8_79, %c0_80] : memref<32x256xf32, #tpu.memory_space<vmem>>, vector<24x256xf32>
    %91 = arith.addf %90, %89 : vector<24x256xf32>
    %c8_81 = arith.constant 8 : index
    %c0_82 = arith.constant 0 : index
    %92 = vector.load %arg13[%c8_81, %c0_82] : memref<32x256xf32, #tpu.memory_space<vmem>>, vector<24x256xf32>
    tpu.vector_store %arg13[%c8_81, %c0_82], %91 {strides = array<i32>} : memref<32x256xf32, #tpu.memory_space<vmem>>, vector<24x256xf32>,
    %c8_83 = arith.constant 8 : index
    %c0_84 = arith.constant 0 : index
    %93 = vector.load %arg13[%c8_83, %c0_84] : memref<32x256xf32, #tpu.memory_space<vmem>>, vector<8x256xf32>
    %cst_85 = arith.constant 5.000000e-01 : f32
    %94 = vector.broadcast %cst_85 : f32 to vector<8x256xf32>
    %95 = arith.mulf %94, %93 : vector<8x256xf32>
    %cst_86 = arith.constant 0.707106769 : f32
    %96 = vector.broadcast %cst_86 : f32 to vector<8x256xf32>
    %97 = arith.mulf %93, %96 : vector<8x256xf32>
    %98 = math.erf %97 : vector<8x256xf32>
    %cst_87 = arith.constant 1.000000e+00 : f32
    %99 = vector.broadcast %cst_87 : f32 to vector<8x256xf32>
    %100 = arith.addf %99, %98 : vector<8x256xf32>
    %101 = arith.mulf %95, %100 : vector<8x256xf32>
    %102 = arith.truncf %101 : vector<8x256xf32> to vector<8x256xbf16>
    %c16_88 = arith.constant 16 : index
    %c128_89 = arith.constant 128 : index
    %103 = vector.load %arg11[%c16_88, %c128_89] : memref<40x512xbf16, #tpu.memory_space<vmem>>, vector<8x256xbf16>
    tpu.vector_store %arg11[%c16_88, %c128_89], %102 {strides = array<i32>} : memref<40x512xbf16, #tpu.memory_space<vmem>>, vector<8x256xbf16>,
    %c16_90 = arith.constant 16 : index
    %c111_91 = arith.constant 111 : index
    %104 = vector.load %arg11[%c16_90, %c111_91] : memref<40x512xbf16, #tpu.memory_space<vmem>>, vector<8x256xbf16>
    %105 = vector.broadcast %7 : vector<1x256xbf16> to vector<8x256xbf16>
    %106 = arith.mulf %104, %105 : vector<8x256xbf16>
    %c144_92 = arith.constant 144 : index
    %c0_93 = arith.constant 0 : index
    %107 = vector.load %arg12[%c144_92, %c0_93] : memref<288x256xbf16, #tpu.memory_space<vmem>>, vector<8x256xbf16>
    tpu.vector_store %arg12[%c144_92, %c0_93], %106 {strides = array<i32>} : memref<288x256xbf16, #tpu.memory_space<vmem>>, vector<8x256xbf16>,
    %c16_94 = arith.constant 16 : index
    %c112_95 = arith.constant 112 : index
    %108 = vector.load %arg11[%c16_94, %c112_95] : memref<40x512xbf16, #tpu.memory_space<vmem>>, vector<8x256xbf16>
    %c152 = arith.constant 152 : index
    %c0_96 = arith.constant 0 : index
    %109 = vector.load %arg12[%c152, %c0_96] : memref<288x256xbf16, #tpu.memory_space<vmem>>, vector<8x256xbf16>
    tpu.vector_store %arg12[%c152, %c0_96], %108 {strides = array<i32>} : memref<288x256xbf16, #tpu.memory_space<vmem>>, vector<8x256xbf16>,
    %c16_97 = arith.constant 16 : index
    %c113_98 = arith.constant 113 : index
    %110 = vector.load %arg11[%c16_97, %c113_98] : memref<40x512xbf16, #tpu.memory_space<vmem>>, vector<8x256xbf16>
    %111 = vector.broadcast %8 : vector<1x256xbf16> to vector<8x256xbf16>
    %112 = arith.mulf %110, %111 : vector<8x256xbf16>
    %c160 = arith.constant 160 : index
    %c0_99 = arith.constant 0 : index
    %113 = vector.load %arg12[%c160, %c0_99] : memref<288x256xbf16, #tpu.memory_space<vmem>>, vector<8x256xbf16>
    tpu.vector_store %arg12[%c160, %c0_99], %112 {strides = array<i32>} : memref<288x256xbf16, #tpu.memory_space<vmem>>, vector<8x256xbf16>,
    %c16_100 = arith.constant 16 : index
    %c127_101 = arith.constant 127 : index
    %114 = vector.load %arg11[%c16_100, %c127_101] : memref<40x512xbf16, #tpu.memory_space<vmem>>, vector<8x256xbf16>
    %115 = vector.broadcast %7 : vector<1x256xbf16> to vector<8x256xbf16>
    %116 = arith.mulf %114, %115 : vector<8x256xbf16>
    %c168 = arith.constant 168 : index
    %c0_102 = arith.constant 0 : index
    %117 = vector.load %arg12[%c168, %c0_102] : memref<288x256xbf16, #tpu.memory_space<vmem>>, vector<8x256xbf16>
    tpu.vector_store %arg12[%c168, %c0_102], %116 {strides = array<i32>} : memref<288x256xbf16, #tpu.memory_space<vmem>>, vector<8x256xbf16>,
    %c16_103 = arith.constant 16 : index
    %c128_104 = arith.constant 128 : index
    %118 = vector.load %arg11[%c16_103, %c128_104] : memref<40x512xbf16, #tpu.memory_space<vmem>>, vector<8x256xbf16>
    %c176 = arith.constant 176 : index
    %c0_105 = arith.constant 0 : index
    %119 = vector.load %arg12[%c176, %c0_105] : memref<288x256xbf16, #tpu.memory_space<vmem>>, vector<8x256xbf16>
    tpu.vector_store %arg12[%c176, %c0_105], %118 {strides = array<i32>} : memref<288x256xbf16, #tpu.memory_space<vmem>>, vector<8x256xbf16>,
    %c16_106 = arith.constant 16 : index
    %c129_107 = arith.constant 129 : index
    %120 = vector.load %arg11[%c16_106, %c129_107] : memref<40x512xbf16, #tpu.memory_space<vmem>>, vector<8x256xbf16>
    %121 = vector.broadcast %8 : vector<1x256xbf16> to vector<8x256xbf16>
    %122 = arith.mulf %120, %121 : vector<8x256xbf16>
    %c184 = arith.constant 184 : index
    %c0_108 = arith.constant 0 : index
    %123 = vector.load %arg12[%c184, %c0_108] : memref<288x256xbf16, #tpu.memory_space<vmem>>, vector<8x256xbf16>
    tpu.vector_store %arg12[%c184, %c0_108], %122 {strides = array<i32>} : memref<288x256xbf16, #tpu.memory_space<vmem>>, vector<8x256xbf16>,
    %c16_109 = arith.constant 16 : index
    %c143_110 = arith.constant 143 : index
    %124 = vector.load %arg11[%c16_109, %c143_110] : memref<40x512xbf16, #tpu.memory_space<vmem>>, vector<8x256xbf16>
    %125 = vector.broadcast %7 : vector<1x256xbf16> to vector<8x256xbf16>
    %126 = arith.mulf %124, %125 : vector<8x256xbf16>
    %c192 = arith.constant 192 : index
    %c0_111 = arith.constant 0 : index
    %127 = vector.load %arg12[%c192, %c0_111] : memref<288x256xbf16, #tpu.memory_space<vmem>>, vector<8x256xbf16>
    tpu.vector_store %arg12[%c192, %c0_111], %126 {strides = array<i32>} : memref<288x256xbf16, #tpu.memory_space<vmem>>, vector<8x256xbf16>,
    %c16_112 = arith.constant 16 : index
    %c144_113 = arith.constant 144 : index
    %128 = vector.load %arg11[%c16_112, %c144_113] : memref<40x512xbf16, #tpu.memory_space<vmem>>, vector<8x256xbf16>
    %c200 = arith.constant 200 : index
    %c0_114 = arith.constant 0 : index
    %129 = vector.load %arg12[%c200, %c0_114] : memref<288x256xbf16, #tpu.memory_space<vmem>>, vector<8x256xbf16>
    tpu.vector_store %arg12[%c200, %c0_114], %128 {strides = array<i32>} : memref<288x256xbf16, #tpu.memory_space<vmem>>, vector<8x256xbf16>,
    %c16_115 = arith.constant 16 : index
    %c145_116 = arith.constant 145 : index
    %130 = vector.load %arg11[%c16_115, %c145_116] : memref<40x512xbf16, #tpu.memory_space<vmem>>, vector<8x256xbf16>
    %131 = vector.broadcast %8 : vector<1x256xbf16> to vector<8x256xbf16>
    %132 = arith.mulf %130, %131 : vector<8x256xbf16>
    %c208 = arith.constant 208 : index
    %c0_117 = arith.constant 0 : index
    %133 = vector.load %arg12[%c208, %c0_117] : memref<288x256xbf16, #tpu.memory_space<vmem>>, vector<8x256xbf16>
    tpu.vector_store %arg12[%c208, %c0_117], %132 {strides = array<i32>} : memref<288x256xbf16, #tpu.memory_space<vmem>>, vector<8x256xbf16>,
    %c0_118 = arith.constant 0 : index
    %c0_119 = arith.constant 0 : index
    %134 = vector.load %arg6[%c0_118, %c0_119] : memref<16x72xbf16, #tpu.memory_space<vmem>>, vector<16x72xbf16>
    %c144_120 = arith.constant 144 : index
    %c0_121 = arith.constant 0 : index
    %135 = vector.load %arg12[%c144_120, %c0_121] : memref<288x256xbf16, #tpu.memory_space<vmem>>, vector<72x256xbf16>
    %cst_122 = arith.constant dense<0.000000e+00> : vector<16x256xf32>
    %136 = tpu.matmul %134, %135, %cst_122 {dimension_numbers = #tpu.dot_dimension_numbers<[1], [0], [0], [1], [0, 0, 1, 1], [], []>} : vector<16x72xbf16>, vector<72x256xbf16>, vector<16x256xf32> -> vector<16x256xf32>
    %c16_123 = arith.constant 16 : index
    %c0_124 = arith.constant 0 : index
    %137 = vector.load %arg13[%c16_123, %c0_124] : memref<32x256xf32, #tpu.memory_space<vmem>>, vector<16x256xf32>
    %138 = arith.addf %137, %136 : vector<16x256xf32>
    %c16_125 = arith.constant 16 : index
    %c0_126 = arith.constant 0 : index
    %139 = vector.load %arg13[%c16_125, %c0_126] : memref<32x256xf32, #tpu.memory_space<vmem>>, vector<16x256xf32>
    tpu.vector_store %arg13[%c16_125, %c0_126], %138 {strides = array<i32>} : memref<32x256xf32, #tpu.memory_space<vmem>>, vector<16x256xf32>,
    %c16_127 = arith.constant 16 : index
    %c0_128 = arith.constant 0 : index
    %140 = vector.load %arg13[%c16_127, %c0_128] : memref<32x256xf32, #tpu.memory_space<vmem>>, vector<8x256xf32>
    %cst_129 = arith.constant 5.000000e-01 : f32
    %141 = vector.broadcast %cst_129 : f32 to vector<8x256xf32>
    %142 = arith.mulf %141, %140 : vector<8x256xf32>
    %cst_130 = arith.constant 0.707106769 : f32
    %143 = vector.broadcast %cst_130 : f32 to vector<8x256xf32>
    %144 = arith.mulf %140, %143 : vector<8x256xf32>
    %145 = math.erf %144 : vector<8x256xf32>
    %cst_131 = arith.constant 1.000000e+00 : f32
    %146 = vector.broadcast %cst_131 : f32 to vector<8x256xf32>
    %147 = arith.addf %146, %145 : vector<8x256xf32>
    %148 = arith.mulf %142, %147 : vector<8x256xf32>
    %149 = arith.truncf %148 : vector<8x256xf32> to vector<8x256xbf16>
    %c24_132 = arith.constant 24 : index
    %c128_133 = arith.constant 128 : index
    %150 = vector.load %arg11[%c24_132, %c128_133] : memref<40x512xbf16, #tpu.memory_space<vmem>>, vector<8x256xbf16>
    tpu.vector_store %arg11[%c24_132, %c128_133], %149 {strides = array<i32>} : memref<40x512xbf16, #tpu.memory_space<vmem>>, vector<8x256xbf16>,
    %c24_134 = arith.constant 24 : index
    %c111_135 = arith.constant 111 : index
    %151 = vector.load %arg11[%c24_134, %c111_135] : memref<40x512xbf16, #tpu.memory_space<vmem>>, vector<8x256xbf16>
    %152 = vector.broadcast %7 : vector<1x256xbf16> to vector<8x256xbf16>
    %153 = arith.mulf %151, %152 : vector<8x256xbf16>
    %c216 = arith.constant 216 : index
    %c0_136 = arith.constant 0 : index
    %154 = vector.load %arg12[%c216, %c0_136] : memref<288x256xbf16, #tpu.memory_space<vmem>>, vector<8x256xbf16>
    tpu.vector_store %arg12[%c216, %c0_136], %153 {strides = array<i32>} : memref<288x256xbf16, #tpu.memory_space<vmem>>, vector<8x256xbf16>,
    %c24_137 = arith.constant 24 : index
    %c112_138 = arith.constant 112 : index
    %155 = vector.load %arg11[%c24_137, %c112_138] : memref<40x512xbf16, #tpu.memory_space<vmem>>, vector<8x256xbf16>
    %c224 = arith.constant 224 : index
    %c0_139 = arith.constant 0 : index
    %156 = vector.load %arg12[%c224, %c0_139] : memref<288x256xbf16, #tpu.memory_space<vmem>>, vector<8x256xbf16>
    tpu.vector_store %arg12[%c224, %c0_139], %155 {strides = array<i32>} : memref<288x256xbf16, #tpu.memory_space<vmem>>, vector<8x256xbf16>,
    %c24_140 = arith.constant 24 : index
    %c113_141 = arith.constant 113 : index
    %157 = vector.load %arg11[%c24_140, %c113_141] : memref<40x512xbf16, #tpu.memory_space<vmem>>, vector<8x256xbf16>
    %158 = vector.broadcast %8 : vector<1x256xbf16> to vector<8x256xbf16>
    %159 = arith.mulf %157, %158 : vector<8x256xbf16>
    %c232 = arith.constant 232 : index
    %c0_142 = arith.constant 0 : index
    %160 = vector.load %arg12[%c232, %c0_142] : memref<288x256xbf16, #tpu.memory_space<vmem>>, vector<8x256xbf16>
    tpu.vector_store %arg12[%c232, %c0_142], %159 {strides = array<i32>} : memref<288x256xbf16, #tpu.memory_space<vmem>>, vector<8x256xbf16>,
    %c24_143 = arith.constant 24 : index
    %c127_144 = arith.constant 127 : index
    %161 = vector.load %arg11[%c24_143, %c127_144] : memref<40x512xbf16, #tpu.memory_space<vmem>>, vector<8x256xbf16>
    %162 = vector.broadcast %7 : vector<1x256xbf16> to vector<8x256xbf16>
    %163 = arith.mulf %161, %162 : vector<8x256xbf16>
    %c240 = arith.constant 240 : index
    %c0_145 = arith.constant 0 : index
    %164 = vector.load %arg12[%c240, %c0_145] : memref<288x256xbf16, #tpu.memory_space<vmem>>, vector<8x256xbf16>
    tpu.vector_store %arg12[%c240, %c0_145], %163 {strides = array<i32>} : memref<288x256xbf16, #tpu.memory_space<vmem>>, vector<8x256xbf16>,
    %c24_146 = arith.constant 24 : index
    %c128_147 = arith.constant 128 : index
    %165 = vector.load %arg11[%c24_146, %c128_147] : memref<40x512xbf16, #tpu.memory_space<vmem>>, vector<8x256xbf16>
    %c248 = arith.constant 248 : index
    %c0_148 = arith.constant 0 : index
    %166 = vector.load %arg12[%c248, %c0_148] : memref<288x256xbf16, #tpu.memory_space<vmem>>, vector<8x256xbf16>
    tpu.vector_store %arg12[%c248, %c0_148], %165 {strides = array<i32>} : memref<288x256xbf16, #tpu.memory_space<vmem>>, vector<8x256xbf16>,
    %c24_149 = arith.constant 24 : index
    %c129_150 = arith.constant 129 : index
    %167 = vector.load %arg11[%c24_149, %c129_150] : memref<40x512xbf16, #tpu.memory_space<vmem>>, vector<8x256xbf16>
    %168 = vector.broadcast %8 : vector<1x256xbf16> to vector<8x256xbf16>
    %169 = arith.mulf %167, %168 : vector<8x256xbf16>
    %c256 = arith.constant 256 : index
    %c0_151 = arith.constant 0 : index
    %170 = vector.load %arg12[%c256, %c0_151] : memref<288x256xbf16, #tpu.memory_space<vmem>>, vector<8x256xbf16>
    tpu.vector_store %arg12[%c256, %c0_151], %169 {strides = array<i32>} : memref<288x256xbf16, #tpu.memory_space<vmem>>, vector<8x256xbf16>,
    %c24_152 = arith.constant 24 : index
    %c143_153 = arith.constant 143 : index
    %171 = vector.load %arg11[%c24_152, %c143_153] : memref<40x512xbf16, #tpu.memory_space<vmem>>, vector<8x256xbf16>
    %172 = vector.broadcast %7 : vector<1x256xbf16> to vector<8x256xbf16>
    %173 = arith.mulf %171, %172 : vector<8x256xbf16>
    %c264 = arith.constant 264 : index
    %c0_154 = arith.constant 0 : index
    %174 = vector.load %arg12[%c264, %c0_154] : memref<288x256xbf16, #tpu.memory_space<vmem>>, vector<8x256xbf16>
    tpu.vector_store %arg12[%c264, %c0_154], %173 {strides = array<i32>} : memref<288x256xbf16, #tpu.memory_space<vmem>>, vector<8x256xbf16>,
    %c24_155 = arith.constant 24 : index
    %c144_156 = arith.constant 144 : index
    %175 = vector.load %arg11[%c24_155, %c144_156] : memref<40x512xbf16, #tpu.memory_space<vmem>>, vector<8x256xbf16>
    %c272 = arith.constant 272 : index
    %c0_157 = arith.constant 0 : index
    %176 = vector.load %arg12[%c272, %c0_157] : memref<288x256xbf16, #tpu.memory_space<vmem>>, vector<8x256xbf16>
    tpu.vector_store %arg12[%c272, %c0_157], %175 {strides = array<i32>} : memref<288x256xbf16, #tpu.memory_space<vmem>>, vector<8x256xbf16>,
    %c24_158 = arith.constant 24 : index
    %c145_159 = arith.constant 145 : index
    %177 = vector.load %arg11[%c24_158, %c145_159] : memref<40x512xbf16, #tpu.memory_space<vmem>>, vector<8x256xbf16>
    %178 = vector.broadcast %8 : vector<1x256xbf16> to vector<8x256xbf16>
    %179 = arith.mulf %177, %178 : vector<8x256xbf16>
    %c280 = arith.constant 280 : index
    %c0_160 = arith.constant 0 : index
    %180 = vector.load %arg12[%c280, %c0_160] : memref<288x256xbf16, #tpu.memory_space<vmem>>, vector<8x256xbf16>
    tpu.vector_store %arg12[%c280, %c0_160], %179 {strides = array<i32>} : memref<288x256xbf16, #tpu.memory_space<vmem>>, vector<8x256xbf16>,
    %c0_161 = arith.constant 0 : index
    %c0_162 = arith.constant 0 : index
    %181 = vector.load %arg7[%c0_161, %c0_162] : memref<8x72xbf16, #tpu.memory_space<vmem>>, vector<8x72xbf16>
    %c216_163 = arith.constant 216 : index
    %c0_164 = arith.constant 0 : index
    %182 = vector.load %arg12[%c216_163, %c0_164] : memref<288x256xbf16, #tpu.memory_space<vmem>>, vector<72x256xbf16>
    %cst_165 = arith.constant dense<0.000000e+00> : vector<8x256xf32>
    %183 = tpu.matmul %181, %182, %cst_165 {dimension_numbers = #tpu.dot_dimension_numbers<[1], [0], [0], [1], [0, 0, 1, 1], [], []>} : vector<8x72xbf16>, vector<72x256xbf16>, vector<8x256xf32> -> vector<8x256xf32>
    %c24_166 = arith.constant 24 : index
    %c0_167 = arith.constant 0 : index
    %184 = vector.load %arg13[%c24_166, %c0_167] : memref<32x256xf32, #tpu.memory_space<vmem>>, vector<8x256xf32>
    %185 = arith.addf %184, %183 : vector<8x256xf32>
    %c24_168 = arith.constant 24 : index
    %c0_169 = arith.constant 0 : index
    %186 = vector.load %arg13[%c24_168, %c0_169] : memref<32x256xf32, #tpu.memory_space<vmem>>, vector<8x256xf32>
    tpu.vector_store %arg13[%c24_168, %c0_169], %185 {strides = array<i32>} : memref<32x256xf32, #tpu.memory_space<vmem>>, vector<8x256xf32>,
    %c24_170 = arith.constant 24 : index
    %c0_171 = arith.constant 0 : index
    %187 = vector.load %arg13[%c24_170, %c0_171] : memref<32x256xf32, #tpu.memory_space<vmem>>, vector<8x256xf32>
    %cst_172 = arith.constant 5.000000e-01 : f32
    %188 = vector.broadcast %cst_172 : f32 to vector<8x256xf32>
    %189 = arith.mulf %188, %187 : vector<8x256xf32>
    %cst_173 = arith.constant 0.707106769 : f32
    %190 = vector.broadcast %cst_173 : f32 to vector<8x256xf32>
    %191 = arith.mulf %187, %190 : vector<8x256xf32>
    %192 = math.erf %191 : vector<8x256xf32>
    %cst_174 = arith.constant 1.000000e+00 : f32
    %193 = vector.broadcast %cst_174 : f32 to vector<8x256xf32>
    %194 = arith.addf %193, %192 : vector<8x256xf32>
    %195 = arith.mulf %189, %194 : vector<8x256xf32>
    %196 = arith.truncf %195 : vector<8x256xf32> to vector<8x256xbf16>
    %c32_175 = arith.constant 32 : index
    %c128_176 = arith.constant 128 : index
    %197 = vector.load %arg11[%c32_175, %c128_176] : memref<40x512xbf16, #tpu.memory_space<vmem>>, vector<8x256xbf16>
    tpu.vector_store %arg11[%c32_175, %c128_176], %196 {strides = array<i32>} : memref<40x512xbf16, #tpu.memory_space<vmem>>, vector<8x256xbf16>,
    %c0_177 = arith.constant 0 : index
    %c128_178 = arith.constant 128 : index
    %198 = vector.load %arg11[%c0_177, %c128_178] : memref<40x512xbf16, #tpu.memory_space<vmem>>, vector<40x256xbf16>
    %c0_179 = arith.constant 0 : index
    %c0_180 = arith.constant 0 : index
    %199 = vector.load %arg8[%c0_179, %c0_180] : memref<8x40xbf16, #tpu.memory_space<vmem>>, vector<8x40xbf16>
    %cst_181 = arith.constant dense<0.000000e+00> : vector<8x256xf32>
    %200 = tpu.matmul %199, %198, %cst_181 {dimension_numbers = #tpu.dot_dimension_numbers<[1], [0], [0], [1], [0, 0, 1, 1], [], []>} : vector<8x40xbf16>, vector<40x256xbf16>, vector<8x256xf32> -> vector<8x256xf32>
    %c0_182 = arith.constant 0 : index
    %c0_183 = arith.constant 0 : index
    %201 = vector.load %arg9[%c0_182, %c0_183] : memref<8x1xf32, #tpu.memory_space<vmem>>, vector<8x1xf32>
    %202 = vector.broadcast %201 : vector<8x1xf32> to vector<8x256xf32>
    %203 = arith.addf %200, %202 : vector<8x256xf32>
    %204 = arith.addf %203, %4 : vector<8x256xf32>
    %205 = vector.shape_cast %204 : vector<8x256xf32> to vector<1x8x256xf32>
    %c0_184 = arith.constant 0 : index
    %c0_185 = arith.constant 0 : index
    %c0_186 = arith.constant 0 : index
    %206 = vector.load %arg10[%c0_184, %c0_185, %c0_186] : memref<1x8x256xf32, #tpu.memory_space<vmem>>, vector<1x8x256xf32>
    tpu.vector_store %arg10[%c0_184, %c0_185, %c0_186], %205 {strides = array<i32>} : memref<1x8x256xf32, #tpu.memory_space<vmem>>, vector<1x8x256xf32>,
    return
  }
  func.func @transform_0(%arg0: i32) -> (i32, i32, i32) {
    %c0_i32 = arith.constant 0 : i32
    %c0_i32_0 = arith.constant 0 : i32
    %c0_i32_1 = arith.constant 0 : i32
    return %arg0, %c0_i32, %c0_i32_0 : i32, i32, i32
  }
  func.func @transform_1(%arg0: i32) -> (i32, i32) {
    %c0_i32 = arith.constant 0 : i32
    %c0_i32_0 = arith.constant 0 : i32
    %c0_i32_1 = arith.constant 0 : i32
    return %c0_i32, %c0_i32_0 : i32, i32
  }
  func.func @transform_2(%arg0: i32) -> (i32, i32) {
    %c0_i32 = arith.constant 0 : i32
    %c0_i32_0 = arith.constant 0 : i32
    %c0_i32_1 = arith.constant 0 : i32
    return %c0_i32, %c0_i32_0 : i32, i32
  }
  func.func @transform_3(%arg0: i32) -> (i32, i32) {
    %c0_i32 = arith.constant 0 : i32
    %c0_i32_0 = arith.constant 0 : i32
    %c0_i32_1 = arith.constant 0 : i32
    return %c0_i32, %c0_i32_0 : i32, i32
  }
  func.func @transform_4(%arg0: i32) -> (i32, i32) {
    %c0_i32 = arith.constant 0 : i32
    %c0_i32_0 = arith.constant 0 : i32
    %c0_i32_1 = arith.constant 0 : i32
    return %c0_i32, %c0_i32_0 : i32, i32
  }
  func.func @transform_5(%arg0: i32) -> (i32, i32) {
    %c0_i32 = arith.constant 0 : i32
    %c0_i32_0 = arith.constant 0 : i32
    %c0_i32_1 = arith.constant 0 : i32
    return %c0_i32, %c0_i32_0 : i32, i32
  }
  func.func @transform_6(%arg0: i32) -> (i32, i32) {
    %c0_i32 = arith.constant 0 : i32
    %c0_i32_0 = arith.constant 0 : i32
    %c0_i32_1 = arith.constant 0 : i32
    return %c0_i32, %c0_i32_0 : i32, i32
  }
  func.func @transform_7(%arg0: i32) -> (i32, i32) {
    %c0_i32 = arith.constant 0 : i32
    %c0_i32_0 = arith.constant 0 : i32
    %c0_i32_1 = arith.constant 0 : i32
    return %c0_i32, %c0_i32_0 : i32, i32
  }
  func.func @transform_8(%arg0: i32) -> (i32, i32) {
    %c0_i32 = arith.constant 0 : i32
    %c0_i32_0 = arith.constant 0 : i32
    %c0_i32_1 = arith.constant 0 : i32
    return %c0_i32, %c0_i32_0 : i32, i32
  }
  func.func @transform_9(%arg0: i32) -> (i32, i32, i32) {
    %c0_i32 = arith.constant 0 : i32
    %c0_i32_0 = arith.constant 0 : i32
    %c0_i32_1 = arith.constant 0 : i32
    return %arg0, %c0_i32, %c0_i32_0 : i32, i32, i32
  }
}

</mosaic_0001>

<llo_original>
// kernel: tpu_custom_call.1
$region0: #{tpu_custom_call.1}
  #allocation0 [shape = 'u32[]', space=smem, size = 0x4, offset = 0x4, fixed_abs, tag = 'smem constant byte address 0x4 - core index']
  #allocation1 [shape = 'u32[72,128]{1,0:T(1,128)}', space=vmem, size = 0x9000, scoped, tag = 'internal scratch']
  #allocation2 [shape = 'bf16[40,512]{1,0:T(8,128)(2,1)}', space=vmem, size = 0xa000, scoped, tag = 'scratch operand']
  #allocation3 [shape = 'bf16[288,256]{1,0:T(8,128)(2,1)}', space=vmem, size = 0x24000, scoped, tag = 'scratch operand']
  #allocation4 [shape = 'f32[32,256]{1,0:T(8,128)}', space=vmem, size = 0x8000, scoped, tag = 'scratch operand']
  %s0 = inlined_call_operand.vmem [shape: f32[2,8,256], index: 0, kind: input, shape index: {}]
  %s1 = inlined_call_operand.hbm [shape: bf16[2,256], index: 1, kind: input, shape index: {}]
  %s2 = inlined_call_operand.hbm [shape: bf16[32,72], index: 2, kind: input, shape index: {}]
  %s3 = inlined_call_operand.vmem [shape: f32[32,1], index: 3, kind: input, shape index: {}]
  %s4 = inlined_call_operand.hbm [shape: bf16[24,72], index: 4, kind: input, shape index: {}]
  %s5 = inlined_call_operand.vmem [shape: bf16[16,72], index: 5, kind: input, shape index: {}]
  %s6 = inlined_call_operand.vmem [shape: bf16[8,72], index: 6, kind: input, shape index: {}]
  %s7 = inlined_call_operand.hbm [shape: bf16[8,40], index: 7, kind: input, shape index: {}]
  %s8 = inlined_call_operand.vmem [shape: f32[8,1], index: 8, kind: input, shape index: {}]
  %s9 = inlined_call_operand.hbm [shape: f32[2,8,256], index: 9, kind: output, shape index: {}]
  %s10 = sld [smem:[#allocation0]]
  $region85: #{tpu_custom_call.1} parent=0
    _
  %s12 = ssub.s32 1, %s10
  %s13 = scalar_select 0, %s12, %s10
  $region1: #{tpu_custom_call.1} parent=0
    #allocation5 [shape = 'u8[1024]{0}', space=vmem, size = 0x400, scoped, tag = 'input window, operand 1, single buffered']
    #allocation6 [shape = 's32[2]{0}', space=sflag, size = 0x8, scoped, tag = 'scoped memory for tpu_custom_call.1']
    #allocation7 [shape = 's32[2]{0}', space=sflag, size = 0x8, scoped, tag = 'scoped memory for tpu_custom_call.1']
    #allocation8 [shape = 'u8[8192]{0}', space=vmem, size = 0x2000, scoped, tag = 'input window, operand 2, single buffered']
    #allocation9 [shape = 's32[1]{0}', space=sflag, size = 0x4, scoped, tag = 'scoped memory for tpu_custom_call.1']
    #allocation10 [shape = 'u8[6144]{0}', space=vmem, size = 0x1800, scoped, tag = 'input window, operand 4, single buffered']
    #allocation11 [shape = 'u8[2048]{0}', space=vmem, size = 0x800, scoped, tag = 'input window, operand 7, single buffered']
    #allocation12 [shape = 's32[1]{0}', space=sflag, size = 0x4, scoped, tag = 'scoped memory for tpu_custom_call.1']
    #allocation13 [shape = 'u8[16384]{0}', space=vmem, size = 0x4000, scoped, tag = 'output window, operand 0']
    %14 = vsyncpa [#allocation6], 0
    %15 = vsyncpa [#allocation9], 0
    %16 = vsyncpa [#allocation12], 0
    %17 = vsyncpa [#allocation7], 0
    %s18 = scalar_lea.sflag [#allocation7], 1
    %19 = vsyncpa %s18, 0
    loop: start=0, step=1, limit=4
    $region2: #{tpu_custom_call.1} parent=1 // loop_pre_header
      _
    $region3: #{tpu_custom_call.1} parent=1 // loop_header
      %s21 = sphi 0, %s25
      %p22 = scmp.ge.s32.totalorder %s21, 4
      %s31 = sphi 0, %s33
      %s34 = sphi 0, %s31
      %s35 = sphi 0, %s34
      %s51 = sphi 0, %s35
      %s55 = sphi 0, %s55
      %s57 = sphi 0, %s55
      %s58 = sphi 0, %s57
      %s72 = sphi 0, %s58
      %s76 = sphi 0, %s76
      %s78 = sphi 0, %s76
      %s79 = sphi 0, %s78
      %s93 = sphi 0, %s79
      %s97 = sphi 0, %s97
      %s99 = sphi 0, %s97
      %s100 = sphi 0, %s99
      %s114 = sphi 0, %s100
      %s118 = sphi 0, %s118
      %s120 = sphi 0, %s118
      %s121 = sphi 0, %s120
      %s135 = sphi 0, %s121
      %s139 = sphi 0, %s139
      %s141 = sphi 0, %s139
      %s142 = sphi 0, %s141
      %s156 = sphi 0, %s142
      %s160 = sphi 0, %s160
      %s162 = sphi 0, %s160
      %s163 = sphi 0, %s162
      %s177 = sphi 0, %s163
      %s181 = sphi 0, %s181
      %s183 = sphi 0, %s181
      %s184 = sphi 0, %s183
      %s198 = sphi 0, %s184
      %s202 = sphi 0, %s202
      %s204 = sphi 0, %s202
      %s205 = sphi 0, %s204
      %s219 = sphi 0, %s205
      %s225 = sphi 0, %s227
      %s228 = sphi 0, %s225
      %s229 = sphi 0, %s228
      %s245 = sphi 0, %s229
    $region4: #{tpu_custom_call.1} parent=1 // loop_header_branch
      %24 = sbr.rel (%p22) target = $region8
    $region5: #{tpu_custom_call.1} parent=1 // loop_body
      %s26 = ssub.s32 %s21, 1
      %s27 = ssub.s32 %s21, 2
      %s28 = sadd.s32 %s21, 1
      %s29 = ssub.s32 %s21, %s28
      %p30 = scmp.eq.s32.totalorder %s29, 0
      %s32 = sadd.s32 %s31, 1
      %s33 = scalar_select %p30, %s31, %s32
      %p36 = pneg %p30
      %p37 = scmp.eq.s32.totalorder %s21, 1
      %p38 = por %p36, %p37
      %p39 = scmp.ne.s32.totalorder %s31, %s34
      %p40 = scmp.eq.s32.totalorder %s21, 0
      %p41 = por %p39, %p40
      %p42 = scmp.ne.s32.totalorder %s31, %s34
      %p43 = scmp.eq.s32.totalorder %s26, 1
      %p44 = por %p42, %p43
      %p45 = scmp.ne.s32.totalorder %s34, %s35
      %p46 = scmp.eq.s32.totalorder %s26, 0
      %p47 = por %p45, %p46
      %p48 = scmp.ne.s32.totalorder %s34, %s35
      %p49 = scmp.eq.s32.totalorder %s27, 1
      %p50 = por %p48, %p49
      %p52 = scmp.ne.s32.totalorder %s35, %s51
      %p53 = scmp.eq.s32.totalorder %s27, 0
      %p54 = por %p52, %p53
      %s56 = sadd.s32 %s55, 1
      %p59 = scmp.eq.s32.totalorder %s21, 1
      %p60 = scmp.ne.s32.totalorder %s55, %s57
      %p61 = scmp.eq.s32.totalorder %s21, 0
      %p62 = por %p60, %p61
      %p63 = scmp.ne.s32.totalorder %s55, %s57
      %p64 = scmp.eq.s32.totalorder %s26, 1
      %p65 = por %p63, %p64
      %p66 = scmp.ne.s32.totalorder %s57, %s58
      %p67 = scmp.eq.s32.totalorder %s26, 0
      %p68 = por %p66, %p67
      %p69 = scmp.ne.s32.totalorder %s57, %s58
      %p70 = scmp.eq.s32.totalorder %s27, 1
      %p71 = por %p69, %p70
      %p73 = scmp.ne.s32.totalorder %s58, %s72
      %p74 = scmp.eq.s32.totalorder %s27, 0
      %p75 = por %p73, %p74
      %s77 = sadd.s32 %s76, 1
      %p80 = scmp.eq.s32.totalorder %s21, 1
      %p81 = scmp.ne.s32.totalorder %s76, %s78
      %p82 = scmp.eq.s32.totalorder %s21, 0
      %p83 = por %p81, %p82
      %p84 = scmp.ne.s32.totalorder %s76, %s78
      %p85 = scmp.eq.s32.totalorder %s26, 1
      %p86 = por %p84, %p85
      %p87 = scmp.ne.s32.totalorder %s78, %s79
      %p88 = scmp.eq.s32.totalorder %s26, 0
      %p89 = por %p87, %p88
      %p90 = scmp.ne.s32.totalorder %s78, %s79
      %p91 = scmp.eq.s32.totalorder %s27, 1
      %p92 = por %p90, %p91
      %p94 = scmp.ne.s32.totalorder %s79, %s93
      %p95 = scmp.eq.s32.totalorder %s27, 0
      %p96 = por %p94, %p95
      %s98 = sadd.s32 %s97, 1
      %p101 = scmp.eq.s32.totalorder %s21, 1
      %p102 = scmp.ne.s32.totalorder %s97, %s99
      %p103 = scmp.eq.s32.totalorder %s21, 0
      %p104 = por %p102, %p103
      %p105 = scmp.ne.s32.totalorder %s97, %s99
      %p106 = scmp.eq.s32.totalorder %s26, 1
      %p107 = por %p105, %p106
      %p108 = scmp.ne.s32.totalorder %s99, %s100
      %p109 = scmp.eq.s32.totalorder %s26, 0
      %p110 = por %p108, %p109
      %p111 = scmp.ne.s32.totalorder %s99, %s100
      %p112 = scmp.eq.s32.totalorder %s27, 1
      %p113 = por %p111, %p112
      %p115 = scmp.ne.s32.totalorder %s100, %s114
      %p116 = scmp.eq.s32.totalorder %s27, 0
      %p117 = por %p115, %p116
      %s119 = sadd.s32 %s118, 1
      %p122 = scmp.eq.s32.totalorder %s21, 1
      %p123 = scmp.ne.s32.totalorder %s118, %s120
      %p124 = scmp.eq.s32.totalorder %s21, 0
      %p125 = por %p123, %p124
      %p126 = scmp.ne.s32.totalorder %s118, %s120
      %p127 = scmp.eq.s32.totalorder %s26, 1
      %p128 = por %p126, %p127
      %p129 = scmp.ne.s32.totalorder %s120, %s121
      %p130 = scmp.eq.s32.totalorder %s26, 0
      %p131 = por %p129, %p130
      %p132 = scmp.ne.s32.totalorder %s120, %s121
      %p133 = scmp.eq.s32.totalorder %s27, 1
      %p134 = por %p132, %p133
      %p136 = scmp.ne.s32.totalorder %s121, %s135
      %p137 = scmp.eq.s32.totalorder %s27, 0
      %p138 = por %p136, %p137
      %s140 = sadd.s32 %s139, 1
      %p143 = scmp.eq.s32.totalorder %s21, 1
      %p144 = scmp.ne.s32.totalorder %s139, %s141
      %p145 = scmp.eq.s32.totalorder %s21, 0
      %p146 = por %p144, %p145
      %p147 = scmp.ne.s32.totalorder %s139, %s141
      %p148 = scmp.eq.s32.totalorder %s26, 1
      %p149 = por %p147, %p148
      %p150 = scmp.ne.s32.totalorder %s141, %s142
      %p151 = scmp.eq.s32.totalorder %s26, 0
      %p152 = por %p150, %p151
      %p153 = scmp.ne.s32.totalorder %s141, %s142
      %p154 = scmp.eq.s32.totalorder %s27, 1
      %p155 = por %p153, %p154
      %p157 = scmp.ne.s32.totalorder %s142, %s156
      %p158 = scmp.eq.s32.totalorder %s27, 0
      %p159 = por %p157, %p158
      %s161 = sadd.s32 %s160, 1
      %p164 = scmp.eq.s32.totalorder %s21, 1
      %p165 = scmp.ne.s32.totalorder %s160, %s162
      %p166 = scmp.eq.s32.totalorder %s21, 0
      %p167 = por %p165, %p166
      %p168 = scmp.ne.s32.totalorder %s160, %s162
      %p169 = scmp.eq.s32.totalorder %s26, 1
      %p170 = por %p168, %p169
      %p171 = scmp.ne.s32.totalorder %s162, %s163
      %p172 = scmp.eq.s32.totalorder %s26, 0
      %p173 = por %p171, %p172
      %p174 = scmp.ne.s32.totalorder %s162, %s163
      %p175 = scmp.eq.s32.totalorder %s27, 1
      %p176 = por %p174, %p175
      %p178 = scmp.ne.s32.totalorder %s163, %s177
      %p179 = scmp.eq.s32.totalorder %s27, 0
      %p180 = por %p178, %p179
      %s182 = sadd.s32 %s181, 1
      %p185 = scmp.eq.s32.totalorder %s21, 1
      %p186 = scmp.ne.s32.totalorder %s181, %s183
      %p187 = scmp.eq.s32.totalorder %s21, 0
      %p188 = por %p186, %p187
      %p189 = scmp.ne.s32.totalorder %s181, %s183
      %p190 = scmp.eq.s32.totalorder %s26, 1
      %p191 = por %p189, %p190
      %p192 = scmp.ne.s32.totalorder %s183, %s184
      %p193 = scmp.eq.s32.totalorder %s26, 0
      %p194 = por %p192, %p193
      %p195 = scmp.ne.s32.totalorder %s183, %s184
      %p196 = scmp.eq.s32.totalorder %s27, 1
      %p197 = por %p195, %p196
      %p199 = scmp.ne.s32.totalorder %s184, %s198
      %p200 = scmp.eq.s32.totalorder %s27, 0
      %p201 = por %p199, %p200
      %s203 = sadd.s32 %s202, 1
      %p206 = scmp.eq.s32.totalorder %s21, 1
      %p207 = scmp.ne.s32.totalorder %s202, %s204
      %p208 = scmp.eq.s32.totalorder %s21, 0
      %p209 = por %p207, %p208
      %p210 = scmp.ne.s32.totalorder %s202, %s204
      %p211 = scmp.eq.s32.totalorder %s26, 1
      %p212 = por %p210, %p211
      %p213 = scmp.ne.s32.totalorder %s204, %s205
      %p214 = scmp.eq.s32.totalorder %s26, 0
      %p215 = por %p213, %p214
      %p216 = scmp.ne.s32.totalorder %s204, %s205
      %p217 = scmp.eq.s32.totalorder %s27, 1
      %p218 = por %p216, %p217
      %p220 = scmp.ne.s32.totalorder %s205, %s219
      %p221 = scmp.eq.s32.totalorder %s27, 0
      %p222 = por %p220, %p221
      %s223 = ssub.s32 %s21, %s28
      %p224 = scmp.eq.s32.totalorder %s223, 0
      %s226 = sadd.s32 %s225, 1
      %s227 = scalar_select %p224, %s225, %s226
      %p230 = pneg %p224
      %p231 = scmp.eq.s32.totalorder %s21, 1
      %p232 = por %p230, %p231
      %p233 = scmp.ne.s32.totalorder %s225, %s228
      %p234 = scmp.eq.s32.totalorder %s21, 0
      %p235 = por %p233, %p234
      %p236 = scmp.ne.s32.totalorder %s225, %s228
      %p237 = scmp.eq.s32.totalorder %s26, 1
      %p238 = por %p236, %p237
      %p239 = scmp.ne.s32.totalorder %s228, %s229
      %p240 = scmp.eq.s32.totalorder %s26, 0
      %p241 = por %p239, %p240
      %p242 = scmp.ne.s32.totalorder %s228, %s229
      %p243 = scmp.eq.s32.totalorder %s27, 1
      %p244 = por %p242, %p243
      %p246 = scmp.ne.s32.totalorder %s229, %s245
      %p247 = scmp.eq.s32.totalorder %s27, 0
      %p248 = por %p246, %p247
      %p249 = scmp.le.s32.totalorder 1, %s21
      %p250 = scmp.lt.s32.totalorder %s21, 3
      %p251 = pnand %p249, %p250
      %p252 = pneg %p251
      // Predicated region
      $region9: #{tpu_custom_call.1} parent=5 // pred_check
        _
      $region10: #{tpu_custom_call.1} parent=5 // pred_check_branch
        %254 = sbr.rel (%p251) target = $region12
      $region11: #{tpu_custom_call.1} parent=5 // pred_region
        %s255 = ssub.s32 %s21, 1
        // Predicated region
        $region13: #{tpu_custom_call.1} parent=11 // pred_check
          %p256 = pneg %p68
        $region14: #{tpu_custom_call.1} parent=11 // pred_check_branch
          %258 = sbr.rel (%p256) target = $region16
        $region15: #{tpu_custom_call.1} parent=11 // pred_region
          %260 = vsyncadd [#allocation6], 0
          %s262 = sshll.u32 %s1, 4
          %s263 = int_to_ptr.hbm [resolvable:$true] %s262
          %s264 = sshll.u32 [#allocation5], 4
          %s265 = int_to_ptr.vmem [resolvable:$true] %s264
          %267 = dma.hbm_to_vmem [thread:$0]  %s263, 32, %s265, [#allocation6]
        $region16: #{tpu_custom_call.1} parent=11 // pred_fallthru
          _
        // Predicated region
        $region17: #{tpu_custom_call.1} parent=11 // pred_check
          %p268 = pneg %p89
        $region18: #{tpu_custom_call.1} parent=11 // pred_check_branch
          %270 = sbr.rel (%p268) target = $region20
        $region19: #{tpu_custom_call.1} parent=11 // pred_region
          %272 = vsyncadd [#allocation9], 0
          %s273 = sshll.u32 %s2, 4
          %s274 = int_to_ptr.hbm [resolvable:$true] %s273
          %s275 = sshll.u32 [#allocation8], 4
          %s276 = int_to_ptr.vmem [resolvable:$true] %s275
          %281 = dma.hbm_to_vmem [thread:$0]  %s274, 256, %s276, [#allocation9], 64, 64, 4
        $region20: #{tpu_custom_call.1} parent=11 // pred_fallthru
          _
        // Predicated region
        $region21: #{tpu_custom_call.1} parent=11 // pred_check
          %p282 = pneg %p110
        $region22: #{tpu_custom_call.1} parent=11 // pred_check_branch
          %284 = sbr.rel (%p282) target = $region24
        $region23: #{tpu_custom_call.1} parent=11 // pred_region
          _
        $region24: #{tpu_custom_call.1} parent=11 // pred_fallthru
          _
        // Predicated region
        $region25: #{tpu_custom_call.1} parent=11 // pred_check
          %p285 = pneg %p131
        $region26: #{tpu_custom_call.1} parent=11 // pred_check_branch
          %287 = sbr.rel (%p285) target = $region28
        $region27: #{tpu_custom_call.1} parent=11 // pred_region
          %289 = vsyncadd [#allocation9], 0
          %s290 = sshll.u32 %s4, 4
          %s291 = int_to_ptr.hbm [resolvable:$true] %s290
          %s292 = sshll.u32 [#allocation10], 4
          %s293 = int_to_ptr.vmem [resolvable:$true] %s292
          %298 = dma.hbm_to_vmem [thread:$0]  %s291, 192, %s293, [#allocation9], 64, 64, 4
        $region28: #{tpu_custom_call.1} parent=11 // pred_fallthru
          _
        // Predicated region
        $region29: #{tpu_custom_call.1} parent=11 // pred_check
          %p299 = pneg %p152
        $region30: #{tpu_custom_call.1} parent=11 // pred_check_branch
          %301 = sbr.rel (%p299) target = $region32
        $region31: #{tpu_custom_call.1} parent=11 // pred_region
          _
        $region32: #{tpu_custom_call.1} parent=11 // pred_fallthru
          _
        // Predicated region
        $region33: #{tpu_custom_call.1} parent=11 // pred_check
          %p302 = pneg %p173
        $region34: #{tpu_custom_call.1} parent=11 // pred_check_branch
          %304 = sbr.rel (%p302) target = $region36
        $region35: #{tpu_custom_call.1} parent=11 // pred_region
          _
        $region36: #{tpu_custom_call.1} parent=11 // pred_fallthru
          _
        // Predicated region
        $region37: #{tpu_custom_call.1} parent=11 // pred_check
          %p305 = pneg %p194
        $region38: #{tpu_custom_call.1} parent=11 // pred_check_branch
          %307 = sbr.rel (%p305) target = $region40
        $region39: #{tpu_custom_call.1} parent=11 // pred_region
          %309 = vsyncadd [#allocation12], 0
          %s311 = sshll.u32 %s7, 4
          %s312 = int_to_ptr.hbm [resolvable:$true] %s311
          %s313 = sshll.u32 [#allocation11], 4
          %s314 = int_to_ptr.vmem [resolvable:$true] %s313
          %316 = dma.hbm_to_vmem [thread:$0]  %s312, 64, %s314, [#allocation12]
        $region40: #{tpu_custom_call.1} parent=11 // pred_fallthru
          _
        // Predicated region
        $region41: #{tpu_custom_call.1} parent=11 // pred_check
          %p317 = pneg %p215
        $region42: #{tpu_custom_call.1} parent=11 // pred_check_branch
          %319 = sbr.rel (%p317) target = $region44
        $region43: #{tpu_custom_call.1} parent=11 // pred_region
          _
        $region44: #{tpu_custom_call.1} parent=11 // pred_fallthru
          _
      $region12: #{tpu_custom_call.1} parent=5 // pred_fallthru
        _
      %p320 = scmp.lt.s32.totalorder %s21, 2
      // Predicated region
      $region45: #{tpu_custom_call.1} parent=5 // pred_check
        %p321 = pneg %p320
      $region46: #{tpu_custom_call.1} parent=5 // pred_check_branch
        %323 = sbr.rel (%p321) target = $region48
      $region47: #{tpu_custom_call.1} parent=5 // pred_region
        // Predicated region
        $region49: #{tpu_custom_call.1} parent=47 // pred_check
          %p324 = pneg %p41
        $region50: #{tpu_custom_call.1} parent=47 // pred_check_branch
          %326 = sbr.rel (%p324) target = $region52
        $region51: #{tpu_custom_call.1} parent=47 // pred_region
          %p327 = scmp.lt.s32.totalorder %s21, 1
          %s328 = scalar_select %p327, %s21, 1
          %s329 = smul.addr %s328, 2
          %s330 = smul.addr %s329, 8
          %s331 = scalar_lea.vmem %s0, %s330
        $region52: #{tpu_custom_call.1} parent=47 // pred_fallthru
          _
      $region48: #{tpu_custom_call.1} parent=5 // pred_fallthru
        _
      %p332 = scmp.le.s32.totalorder 1, %s21
      %p333 = scmp.lt.s32.totalorder %s21, 3
      %p334 = pnand %p332, %p333
      %p335 = pneg %p334
      // Predicated region
      $region53: #{tpu_custom_call.1} parent=5 // pred_check
        _
      $region54: #{tpu_custom_call.1} parent=5 // pred_check_branch
        %337 = sbr.rel (%p334) target = $region56
      $region55: #{tpu_custom_call.1} parent=5 // pred_region
        %s338 = ssub.s32 %s21, 1
        // Predicated region
        $region57: #{tpu_custom_call.1} parent=55 // pred_check
          %p339 = pneg %p68
        $region58: #{tpu_custom_call.1} parent=55 // pred_check_branch
          %341 = sbr.rel (%p339) target = $region60
        $region59: #{tpu_custom_call.1} parent=55 // pred_region
          %343 = dma.done [#allocation6], 32
        $region60: #{tpu_custom_call.1} parent=55 // pred_fallthru
          _
        // Predicated region
        $region61: #{tpu_custom_call.1} parent=55 // pred_check
          %p344 = pneg %p89
        $region62: #{tpu_custom_call.1} parent=55 // pred_check_branch
          %346 = sbr.rel (%p344) target = $region64
        $region63: #{tpu_custom_call.1} parent=55 // pred_region
          %348 = dma.done [#allocation9], 256
        $region64: #{tpu_custom_call.1} parent=55 // pred_fallthru
          _
        // Predicated region
        $region65: #{tpu_custom_call.1} parent=55 // pred_check
          %p349 = pneg %p131
        $region66: #{tpu_custom_call.1} parent=55 // pred_check_branch
          %351 = sbr.rel (%p349) target = $region68
        $region67: #{tpu_custom_call.1} parent=55 // pred_region
          %353 = dma.done [#allocation9], 192
        $region68: #{tpu_custom_call.1} parent=55 // pred_fallthru
          _
        // Predicated region
        $region69: #{tpu_custom_call.1} parent=55 // pred_check
          %p354 = pneg %p194
        $region70: #{tpu_custom_call.1} parent=55 // pred_check_branch
          %356 = sbr.rel (%p354) target = $region72
        $region71: #{tpu_custom_call.1} parent=55 // pred_region
          %358 = dma.done [#allocation12], 64
        $region72: #{tpu_custom_call.1} parent=55 // pred_fallthru
          _
        %p359 = scmp.lt.s32.totalorder %s26, 1
        %s360 = scalar_select %p359, %s26, 1
        %s361 = smul.addr %s360, 2
        %s362 = smul.addr %s361, 8
        %s363 = scalar_lea.vmem %s0, %s362
        %p364 = pneg %p47
        %p365 = pneg %p44
        %p366 = pneg %p68
        %p367 = pneg %p65
        %p368 = pneg %p89
        %p369 = pneg %p86
        %p370 = pneg %p110
        %p371 = pneg %p107
        %p372 = pneg %p131
        %p373 = pneg %p128
        %p374 = pneg %p152
        %p375 = pneg %p149
        %p376 = pneg %p173
        %p377 = pneg %p170
        %p378 = pneg %p194
        %p379 = pneg %p191
        %p380 = pneg %p215
        %p381 = pneg %p212
        %p382 = pneg %p241
        %p383 = pneg %p238
        %s384 = sand.u32 %s228, 1
        %s385 = scalar_lea.sflag [#allocation7], %s384
        %s386 = sand.u32 %s228, 1
        %s387 = smul.addr %s386, 16
        %s388 = scalar_lea.vmem [#allocation13], %s387
        %p389 = scmp.lt.s32.totalorder %s26, 1
        %s390 = scalar_select %p389, %s26, 1
        %s391 = smul.addr %s390, 2
        %s392 = smul.addr %s391, 8
        %s393 = scalar_lea.vmem %s0, %s392
        %395 = vst [vmem:[#allocation2] sm:$0xf] 0
        %396 = vst [vmem:[#allocation2 + $0x10] sm:$0xf] 0
        %397 = vst [vmem:[#allocation2 + $0x20] sm:$0xf] 0
        %398 = vst [vmem:[#allocation2 + $0x30] sm:$0xf] 0
        %399 = vst [vmem:[#allocation2 + $0xc] sm:$0xf] 0
        %400 = vst [vmem:[#allocation2 + $0x1c] sm:$0xf] 0
        %401 = vst [vmem:[#allocation2 + $0x2c] sm:$0xf] 0
        %402 = vst [vmem:[#allocation2 + $0x3c] sm:$0xf] 0
        %v403 = vld [vmem:[%s393] sm:$0xff]
        %v404 = vld [vmem:[%s393 + $0x8] sm:$0xff]
        %v405 = vpack.c.bf16 %v404, %v403
        %406 = vst [vmem:[#allocation2 + $0x4] sm:$0xff] %v405
        %v407 = vld [vmem:[#allocation5] sm:$0x3]
        %v408 = vld [vmem:[#allocation2] sm:$0xff]
        %v409 = vld [vmem:[#allocation2 + $0x8] sm:$0xf]
        %411 = vst [vmem:[#allocation1] ss:$9 sm:$0xff] %v407
        %v412 = vld [vmem:[#allocation1] sm:$0xff]
        %v413 = vld [vmem:[#allocation1 + $0x9] sm:$0xff]
        %v414 = vpack.i.b16 %v412, %v412
        %v416 = vperm.slane %v414, 0
        %v417 = vpack.i.b16 %v413, %v413
        %v419 = vperm.slane %v417, 0
        %v420 = vunpack.c.l.bf16 %v408
        %v421 = vunpack.c.h.bf16 %v408
        %v422 = vunpack.c.l.bf16 %v409
        %v423 = vunpack.c.l.bf16 %v416
        %v424 = vunpack.c.l.bf16 %v419
        %427 = vrot.lane.b32.xlu0 %v423, 111
        %v428 = vpop.permute.xlu0 %427
        %429 = vrot.lane.b32.xlu0 %v424, 111
        %v430 = vpop.permute.xlu0 %429
        %vm431 = vcmask 908288
        %v432 = vsel %vm431, %v428, %v430
        %v436 = vmul.f32 %v420, %v428
        %v437 = vmul.f32 %v421, %v432
        %v438 = vmul.f32 %v422, %v430
        %v439 = vpack.c.bf16 %v437, %v436
        %v440 = vpack.c.bf16 %v438, %v438
        %443 = vrot.lane.b32.xlu0 %v439, 17
        %v444 = vpop.permute.xlu0 %443
        %445 = vrot.lane.b32.xlu0 %v440, 17
        %v446 = vpop.permute.xlu0 %445
        %v447 = vrot.slane %v444, 4
        %v448 = vrot.slane %v446, 4
        %vm449 = vcmask 1043456
        %v450 = vsel %vm449, %v447, %v448
        %vm451 = vcmask 138240
        %v452 = vsel %vm451, %v444, %v450
        %454 = vst [vmem:[#allocation3] sm:$0xff] %v452
        %v455 = vld [vmem:[#allocation2] sm:$0xff]
        %v456 = vld [vmem:[#allocation2 + $0x8] sm:$0xf]
        %459 = vrot.lane.b32.xlu0 %v455, 16
        %v460 = vpop.permute.xlu0 %459
        %461 = vrot.lane.b32.xlu0 %v456, 16
        %v462 = vpop.permute.xlu0 %461
        %v463 = vrot.slane %v460, 4
        %v464 = vrot.slane %v462, 4
        %v465 = vsel %vm449, %v463, %v464
        %vm466 = vcmask 130048
        %v467 = vsel %vm466, %v460, %v465
        %469 = vst [vmem:[#allocation3 + $0x8] sm:$0xff] %v467
        %v470 = vld [vmem:[#allocation2] sm:$0xff]
        %v471 = vld [vmem:[#allocation2 + $0x8] sm:$0xf]
        %472 = vst [vmem:[#allocation1] ss:$9 sm:$0xff] %v407
        %v473 = vld [vmem:[#allocation1] sm:$0xff]
        %v474 = vld [vmem:[#allocation1 + $0x9] sm:$0xff]
        %v475 = vshrl.u32 %v473, 16
        %v476 = vpack.i.b16 %v475, %v475
        %v478 = vperm.slane %v476, 0
        %v479 = vshrl.u32 %v474, 16
        %v480 = vpack.i.b16 %v479, %v479
        %v482 = vperm.slane %v480, 0
        %v483 = vunpack.c.l.bf16 %v470
        %v484 = vunpack.c.h.bf16 %v470
        %v485 = vunpack.c.l.bf16 %v471
        %v486 = vunpack.c.l.bf16 %v478
        %v487 = vunpack.c.l.bf16 %v482
        %490 = vrot.lane.b32.xlu0 %v486, 113
        %v491 = vpop.permute.xlu0 %490
        %492 = vrot.lane.b32.xlu0 %v487, 113
        %v493 = vpop.permute.xlu0 %492
        %vm494 = vcmask 924672
        %v495 = vsel %vm494, %v491, %v493
        %v499 = vmul.f32 %v483, %v491
        %v500 = vmul.f32 %v484, %v495
        %v501 = vmul.f32 %v485, %v493
        %v502 = vpack.c.bf16 %v500, %v499
        %v503 = vpack.c.bf16 %v501, %v501
        %506 = vrot.lane.b32.xlu0 %v502, 15
        %v507 = vpop.permute.xlu0 %506
        %508 = vrot.lane.b32.xlu0 %v503, 15
        %v509 = vpop.permute.xlu0 %508
        %v510 = vrot.slane %v507, 4
        %v511 = vrot.slane %v509, 4
        %v512 = vsel %vm449, %v510, %v511
        %vm513 = vcmask 121856
        %v514 = vsel %vm513, %v507, %v512
        %516 = vst [vmem:[#allocation3 + $0x10] sm:$0xff] %v514
        %v517 = vld [vmem:[#allocation2] sm:$0xff]
        %v518 = vld [vmem:[#allocation2 + $0x8] sm:$0xf]
        %v519 = vunpack.c.l.bf16 %v517
        %v520 = vunpack.c.h.bf16 %v517
        %v521 = vunpack.c.l.bf16 %v518
        %522 = vrot.lane.b32.xlu0 %v423, 127
        %v523 = vpop.permute.xlu0 %522
        %524 = vrot.lane.b32.xlu0 %v424, 127
        %v525 = vpop.permute.xlu0 %524
        %vm526 = vcmask 1039360
        %v527 = vsel %vm526, %v523, %v525
        %v531 = vmul.f32 %v519, %v523
        %v532 = vmul.f32 %v520, %v527
        %v533 = vmul.f32 %v521, %v525
        %v534 = vpack.c.bf16 %v532, %v531
        %v535 = vpack.c.bf16 %v533, %v533
        %538 = vrot.lane.b32.xlu0 %v534, 1
        %v539 = vpop.permute.xlu0 %538
        %540 = vrot.lane.b32.xlu0 %v535, 1
        %v541 = vpop.permute.xlu0 %540
        %v542 = vrot.slane %v539, 4
        %v543 = vrot.slane %v541, 4
        %v544 = vsel %vm449, %v542, %v543
        %vm545 = vcmask 7168
        %v546 = vsel %vm545, %v539, %v544
        %548 = vst [vmem:[#allocation3 + $0x18] sm:$0xff] %v546
        %v549 = vld [vmem:[#allocation2 + $0x4] sm:$0xff]
        %550 = vst [vmem:[#allocation3 + $0x20] sm:$0xff] %v549
        %v551 = vld [vmem:[#allocation2 + $0x4] sm:$0xff]
        %v552 = vld [vmem:[#allocation2 + $0xc] sm:$0xf]
        %v553 = vunpack.c.l.bf16 %v551
        %v554 = vunpack.c.h.bf16 %v551
        %v555 = vunpack.c.l.bf16 %v552
        %556 = vrot.lane.b32.xlu0 %v486, 1
        %v557 = vpop.permute.xlu0 %556
        %558 = vrot.lane.b32.xlu0 %v487, 1
        %v559 = vpop.permute.xlu0 %558
        %vm560 = vcmask 7168
        %v561 = vsel %vm560, %v557, %v559
        %v565 = vmul.f32 %v553, %v557
        %v566 = vmul.f32 %v554, %v561
        %v567 = vmul.f32 %v555, %v559
        %v568 = vpack.c.bf16 %v566, %v565
        %v569 = vpack.c.bf16 %v567, %v567
        %572 = vrot.lane.b32.xlu0 %v568, 127
        %v573 = vpop.permute.xlu0 %572
        %574 = vrot.lane.b32.xlu0 %v569, 127
        %v575 = vpop.permute.xlu0 %574
        %v576 = vrot.slane %v573, 4
        %v577 = vrot.slane %v575, 4
        %v578 = vsel %vm449, %v576, %v577
        %vm579 = vcmask 1039360
        %v580 = vsel %vm579, %v573, %v578
        %582 = vst [vmem:[#allocation3 + $0x28] sm:$0xff] %v580
        %v583 = vld [vmem:[#allocation2 + $0x4] sm:$0xff]
        %v584 = vld [vmem:[#allocation2 + $0xc] sm:$0xf]
        %v585 = vunpack.c.l.bf16 %v583
        %v586 = vunpack.c.h.bf16 %v583
        %v587 = vunpack.c.l.bf16 %v584
        %588 = vrot.lane.b32.xlu0 %v423, 15
        %v589 = vpop.permute.xlu0 %588
        %590 = vrot.lane.b32.xlu0 %v424, 15
        %v591 = vpop.permute.xlu0 %590
        %vm592 = vcmask 121856
        %v593 = vsel %vm592, %v589, %v591
        %v597 = vmul.f32 %v585, %v589
        %v598 = vmul.f32 %v586, %v593
        %v599 = vmul.f32 %v587, %v591
        %v600 = vpack.c.bf16 %v598, %v597
        %v601 = vpack.c.bf16 %v599, %v599
        %604 = vrot.lane.b32.xlu0 %v600, 113
        %v605 = vpop.permute.xlu0 %604
        %606 = vrot.lane.b32.xlu0 %v601, 113
        %v607 = vpop.permute.xlu0 %606
        %v608 = vrot.slane %v605, 4
        %v609 = vrot.slane %v607, 4
        %v610 = vsel %vm449, %v608, %v609
        %vm611 = vcmask 924672
        %v612 = vsel %vm611, %v605, %v610
        %614 = vst [vmem:[#allocation3 + $0x30] sm:$0xff] %v612
        %v615 = vld [vmem:[#allocation2 + $0x4] sm:$0xff]
        %v616 = vld [vmem:[#allocation2 + $0xc] sm:$0xf]
        %619 = vrot.lane.b32.xlu0 %v615, 112
        %v620 = vpop.permute.xlu0 %619
        %621 = vrot.lane.b32.xlu0 %v616, 112
        %v622 = vpop.permute.xlu0 %621
        %v623 = vrot.slane %v620, 4
        %v624 = vrot.slane %v622, 4
        %v625 = vsel %vm449, %v623, %v624
        %vm626 = vcmask 916480
        %v627 = vsel %vm626, %v620, %v625
        %629 = vst [vmem:[#allocation3 + $0x38] sm:$0xff] %v627
        %v630 = vld [vmem:[#allocation2 + $0x4] sm:$0xff]
        %v631 = vld [vmem:[#allocation2 + $0xc] sm:$0xf]
        %v632 = vunpack.c.l.bf16 %v630
        %v633 = vunpack.c.h.bf16 %v630
        %v634 = vunpack.c.l.bf16 %v631
        %635 = vrot.lane.b32.xlu0 %v486, 17
        %v636 = vpop.permute.xlu0 %635
        %637 = vrot.lane.b32.xlu0 %v487, 17
        %v638 = vpop.permute.xlu0 %637
        %vm639 = vcmask 138240
        %v640 = vsel %vm639, %v636, %v638
        %v644 = vmul.f32 %v632, %v636
        %v645 = vmul.f32 %v633, %v640
        %v646 = vmul.f32 %v634, %v638
        %v647 = vpack.c.bf16 %v645, %v644
        %v648 = vpack.c.bf16 %v646, %v646
        %651 = vrot.lane.b32.xlu0 %v647, 111
        %v652 = vpop.permute.xlu0 %651
        %653 = vrot.lane.b32.xlu0 %v648, 111
        %v654 = vpop.permute.xlu0 %653
        %v655 = vrot.slane %v652, 4
        %v656 = vrot.slane %v654, 4
        %v657 = vsel %vm449, %v655, %v656
        %vm658 = vcmask 908288
        %v659 = vsel %vm658, %v652, %v657
        %661 = vst [vmem:[#allocation3 + $0x40] sm:$0xff] %v659
        %v662 = vld [vmem:[#allocation8] sm:$0xf]
        %v663 = vld [vmem:[#allocation8 + $0x4] sm:$0xf]
        %v664 = vld [vmem:[#allocation8 + $0x8] sm:$0xf]
        %v665 = vld [vmem:[#allocation8 + $0xc] sm:$0xf]
        %v666 = vld [vmem:[#allocation3] sm:$0xff]
        %v667 = vld [vmem:[#allocation3 + $0x8] sm:$0xff]
        %v668 = vld [vmem:[#allocation3 + $0x10] sm:$0xff]
        %v669 = vld [vmem:[#allocation3 + $0x18] sm:$0xff]
        %v670 = vld [vmem:[#allocation3 + $0x20] sm:$0xff]
        %v671 = vld [vmem:[#allocation3 + $0x28] sm:$0xff]
        %v672 = vld [vmem:[#allocation3 + $0x30] sm:$0xff]
        %v673 = vld [vmem:[#allocation3 + $0x38] sm:$0xff]
        %v674 = vld [vmem:[#allocation3 + $0x40] sm:$0xff]
        %v675 = vld [vmem:[%s3] sm:$0xff]
        %v676 = vld [vmem:[%s3 + $0x8] sm:$0xff]
        %v677 = vld [vmem:[%s3 + $0x10] sm:$0xff]
        %v678 = vld [vmem:[%s3 + $0x18] sm:$0xff]
        %680 = vset.pattern.permute.xlu0 0
        %681 = vperm.xlu0 %680, %v675
        %v682 = vpop.permute.xlu0 %681
        %685 = vset.pattern.permute.xlu0 0
        %686 = vperm.xlu0 %685, %v676
        %v687 = vpop.permute.xlu0 %686
        %690 = vset.pattern.permute.xlu0 0
        %691 = vperm.xlu0 %690, %v677
        %v692 = vpop.permute.xlu0 %691
        %695 = vset.pattern.permute.xlu0 0
        %696 = vperm.xlu0 %695, %v678
        %v697 = vpop.permute.xlu0 %696
        %v703 = vunpack.c.l.b16 %v662
        %v704 = vunpack.c.l.b16 %v663
        %v705 = vunpack.c.l.b16 %v664
        %v706 = vunpack.c.l.b16 %v665
        %v707 = vpack.c.b16 %v704, %v703
        %v708 = vpack.c.b16 %v706, %v705
        %v718 = vunpack.c.l.b16 %v666
        %v719 = vunpack.c.h.b16 %v666
        %v720 = vunpack.c.l.b16 %v667
        %v721 = vunpack.c.h.b16 %v667
        %v722 = vunpack.c.l.b16 %v668
        %v723 = vunpack.c.h.b16 %v668
        %v724 = vunpack.c.l.b16 %v669
        %v725 = vunpack.c.h.b16 %v669
        %v726 = vunpack.c.l.b16 %v670
        %v727 = vunpack.c.h.b16 %v670
        %v728 = vunpack.c.l.b16 %v671
        %v729 = vunpack.c.h.b16 %v671
        %v730 = vunpack.c.l.b16 %v672
        %v731 = vunpack.c.h.b16 %v672
        %v732 = vunpack.c.l.b16 %v673
        %v733 = vunpack.c.h.b16 %v673
        %v734 = vunpack.c.l.b16 %v674
        %v735 = vunpack.c.h.b16 %v674
        %v736 = vpack.c.b16 %v720, %v718
        %v737 = vpack.c.b16 %v721, %v719
        %v738 = vpack.c.b16 %v724, %v722
        %v739 = vpack.c.b16 %v725, %v723
        %v740 = vpack.c.b16 %v728, %v726
        %v741 = vpack.c.b16 %v729, %v727
        %v742 = vpack.c.b16 %v732, %v730
        %v743 = vpack.c.b16 %v733, %v731
        %v744 = vpack.c.b16 %v734, %v734
        %v745 = vpack.c.b16 %v735, %v735
        %vm754 = vcmask 588800
        %v756 = vsel %vm754, %v707, 0
        %v759 = vsel %vm754, %v708, 0
        %vm761 = vcmask 1043456
        %v763 = vsel %vm761, %v744, 0
        %v766 = vsel %vm761, %v745, 0
        %768 = vmatpush.bf16.msra.mxu0 0
        %769 = vmatpush.bf16.msra.mxu0 0
        %770 = vmatpush.bf16.msra.mxu0 0
        %771 = vmatpush.bf16.msra.mxu0 %v763
        %772 = vmatpush.bf16.msra.mxu0 %v742
        %773 = vmatpush.bf16.msra.mxu0 %v740
        %774 = vmatpush.bf16.msra.mxu0 %v738
        %775 = vmatpush.bf16.msra.mxu0 %v736
        %776 = vmatmul.bf16.gmra.mxu0 %v756
        %v777 = vpop.f32.mrf.mxu0
        %v778 = vadd.f32 %v682, %v777
        %v779 = vpop.f32.mrf.mxu0
        %v780 = vadd.f32 %v687, %v779
        %781 = vmatmul.bf16.gmra.mxu0 %v759
        %v782 = vpop.f32.mrf.mxu0
        %v783 = vadd.f32 %v692, %v782
        %v784 = vpop.f32.mrf.mxu0
        %v785 = vadd.f32 %v697, %v784
        %786 = vdwg.mxu0
        %787 = vmatpush.bf16.msra.mxu0 0
        %788 = vmatpush.bf16.msra.mxu0 0
        %789 = vmatpush.bf16.msra.mxu0 0
        %790 = vmatpush.bf16.msra.mxu0 %v766
        %791 = vmatpush.bf16.msra.mxu0 %v743
        %792 = vmatpush.bf16.msra.mxu0 %v741
        %793 = vmatpush.bf16.msra.mxu0 %v739
        %794 = vmatpush.bf16.msra.mxu0 %v737
        %795 = vmatmul.bf16.gmra.mxu0 %v756
        %v796 = vpop.f32.mrf.mxu0
        %v797 = vadd.f32 %v682, %v796
        %v798 = vpop.f32.mrf.mxu0
        %v799 = vadd.f32 %v687, %v798
        %800 = vmatmul.bf16.gmra.mxu0 %v759
        %v801 = vpop.f32.mrf.mxu0
        %v802 = vadd.f32 %v692, %v801
        %v803 = vpop.f32.mrf.mxu0
        %v804 = vadd.f32 %v697, %v803
        %805 = vdwg.mxu0
        %806 = vst [vmem:[#allocation4] sm:$0xff] %v778
        %807 = vst [vmem:[#allocation4 + $0x8] sm:$0xff] %v797
        %808 = vst [vmem:[#allocation4 + $0x10] sm:$0xff] %v780
        %809 = vst [vmem:[#allocation4 + $0x18] sm:$0xff] %v799
        %810 = vst [vmem:[#allocation4 + $0x20] sm:$0xff] %v783
        %811 = vst [vmem:[#allocation4 + $0x28] sm:$0xff] %v802
        %812 = vst [vmem:[#allocation4 + $0x30] sm:$0xff] %v785
        %813 = vst [vmem:[#allocation4 + $0x38] sm:$0xff] %v804
        %v814 = vld [vmem:[#allocation4] sm:$0xff]
        %v815 = vld [vmem:[#allocation4 + $0x8] sm:$0xff]
        %v816 = vmul.f32 %v814, 0.5
        %v817 = vmul.f32 %v815, 0.5
        %v818 = vmul.f32 %v814, 0.70710677
        %v819 = vmul.f32 %v815, 0.70710677
        %v820 = vmul.f32 %v818, %v818
        %v821 = vmin.f32 16.0, %v820
        %v822 = vmul.f32 %v821, 2.1237322e-06
        %v823 = vadd.f32 %v822, 0.00028619796
        %v824 = vmul.f32 %v821, %v823
        %v825 = vadd.f32 %v824, 0.0036580483
        %v826 = vmul.f32 %v821, %v825
        %v827 = vadd.f32 %v826, 0.05243302
        %v828 = vmul.f32 %v821, %v827
        %v829 = vadd.f32 %v828, 0.18741608
        %v830 = vmul.f32 %v821, %v829
        %v831 = vadd.f32 %v830, 1.1283791
        %v832 = vmul.f32 %v818, %v831
        %v833 = vmul.f32 %v821, 3.8918573e-05
        %v834 = vadd.f32 %v833, 0.001143296
        %v835 = vmul.f32 %v821, %v834
        %v836 = vadd.f32 %v835, 0.014752088
        %v837 = vmul.f32 %v821, %v836
        %v838 = vadd.f32 %v837, 0.112945676
        %v839 = vmul.f32 %v821, %v838
        %v840 = vadd.f32 %v839, 0.4994258
        %v841 = vmul.f32 %v821, %v840
        %v842 = vadd.f32 %v841, 1.0
        %v843 = vrcp.pop %v842
        %v844 = vmul.f32 %v842, %v843
        %v845 = vsub.f32 1.0, %v844
        %v846 = vmul.f32 %v843, %v845
        %v847 = vadd.f32 %v843, %v846
        %vm848 = vweird.f32 %v842
        %vm849 = vweird.f32 %v843
        %vm850 = vmor %vm848, %vm849
        %v851 = vsel %vm850, %v843, %v847
        %v852 = vand.u32 2147483647, %v842
        %vm853 = vcmp.eq.f32.partialorder %v852, 8.507059e+37
        %v854 = vand.u32 %v842, 2147483648
        %v855 = vor.u32 1.1754944e-38, %v854
        %v856 = vsel %vm853, %v855, %v851
        %v857 = vmul.f32 %v832, %v856
        %v858 = vmin.f32 %v857, 1.0
        %v859 = vmax.f32 %v858, -1.0
        %v860 = vmul.f32 %v819, %v819
        %v861 = vmin.f32 16.0, %v860
        %v862 = vmul.f32 %v861, 2.1237322e-06
        %v863 = vadd.f32 %v862, 0.00028619796
        %v864 = vmul.f32 %v861, %v863
        %v865 = vadd.f32 %v864, 0.0036580483
        %v866 = vmul.f32 %v861, %v865
        %v867 = vadd.f32 %v866, 0.05243302
        %v868 = vmul.f32 %v861, %v867
        %v869 = vadd.f32 %v868, 0.18741608
        %v870 = vmul.f32 %v861, %v869
        %v871 = vadd.f32 %v870, 1.1283791
        %v872 = vmul.f32 %v819, %v871
        %v873 = vmul.f32 %v861, 3.8918573e-05
        %v874 = vadd.f32 %v873, 0.001143296
        %v875 = vmul.f32 %v861, %v874
        %v876 = vadd.f32 %v875, 0.014752088
        %v877 = vmul.f32 %v861, %v876
        %v878 = vadd.f32 %v877, 0.112945676
        %v879 = vmul.f32 %v861, %v878
        %v880 = vadd.f32 %v879, 0.4994258
        %v881 = vmul.f32 %v861, %v880
        %v882 = vadd.f32 %v881, 1.0
        %v883 = vrcp.pop %v882
        %v884 = vmul.f32 %v882, %v883
        %v885 = vsub.f32 1.0, %v884
        %v886 = vmul.f32 %v883, %v885
        %v887 = vadd.f32 %v883, %v886
        %vm888 = vweird.f32 %v882
        %vm889 = vweird.f32 %v883
        %vm890 = vmor %vm888, %vm889
        %v891 = vsel %vm890, %v883, %v887
        %v892 = vand.u32 2147483647, %v882
        %vm893 = vcmp.eq.f32.partialorder %v892, 8.507059e+37
        %v894 = vand.u32 %v882, 2147483648
        %v895 = vor.u32 1.1754944e-38, %v894
        %v896 = vsel %vm893, %v895, %v891
        %v897 = vmul.f32 %v872, %v896
        %v898 = vmin.f32 %v897, 1.0
        %v899 = vmax.f32 %v898, -1.0
        %v900 = vadd.f32 %v859, 1.0
        %v901 = vadd.f32 %v899, 1.0
        %v902 = vmul.f32 %v816, %v900
        %v903 = vmul.f32 %v817, %v901
        %v904 = vpack.c.bf16 %v903, %v902
        %905 = vst [vmem:[#allocation2 + $0x14] sm:$0xff] %v904
        %v906 = vld [vmem:[#allocation2 + $0x10] sm:$0xff]
        %v907 = vld [vmem:[#allocation2 + $0x18] sm:$0xf]
        %v908 = vunpack.c.l.bf16 %v906
        %v909 = vunpack.c.h.bf16 %v906
        %v910 = vunpack.c.l.bf16 %v907
        %v911 = vmul.f32 %v908, %v428
        %v912 = vmul.f32 %v909, %v432
        %v913 = vmul.f32 %v910, %v430
        %v914 = vpack.c.bf16 %v912, %v911
        %v915 = vpack.c.bf16 %v913, %v913
        %918 = vrot.lane.b32.xlu0 %v914, 17
        %v919 = vpop.permute.xlu0 %918
        %920 = vrot.lane.b32.xlu0 %v915, 17
        %v921 = vpop.permute.xlu0 %920
        %v922 = vrot.slane %v919, 4
        %v923 = vrot.slane %v921, 4
        %v924 = vsel %vm449, %v922, %v923
        %v925 = vsel %vm451, %v919, %v924
        %927 = vst [vmem:[#allocation3 + $0x48] sm:$0xff] %v925
        %v928 = vld [vmem:[#allocation2 + $0x10] sm:$0xff]
        %v929 = vld [vmem:[#allocation2 + $0x18] sm:$0xf]
        %932 = vrot.lane.b32.xlu0 %v928, 16
        %v933 = vpop.permute.xlu0 %932
        %934 = vrot.lane.b32.xlu0 %v929, 16
        %v935 = vpop.permute.xlu0 %934
        %v936 = vrot.slane %v933, 4
        %v937 = vrot.slane %v935, 4
        %v938 = vsel %vm449, %v936, %v937
        %v939 = vsel %vm466, %v933, %v938
        %941 = vst [vmem:[#allocation3 + $0x50] sm:$0xff] %v939
        %v942 = vld [vmem:[#allocation2 + $0x10] sm:$0xff]
        %v943 = vld [vmem:[#allocation2 + $0x18] sm:$0xf]
        %v944 = vunpack.c.l.bf16 %v942
        %v945 = vunpack.c.h.bf16 %v942
        %v946 = vunpack.c.l.bf16 %v943
        %v947 = vmul.f32 %v944, %v491
        %v948 = vmul.f32 %v945, %v495
        %v949 = vmul.f32 %v946, %v493
        %v950 = vpack.c.bf16 %v948, %v947
        %v951 = vpack.c.bf16 %v949, %v949
        %954 = vrot.lane.b32.xlu0 %v950, 15
        %v955 = vpop.permute.xlu0 %954
        %956 = vrot.lane.b32.xlu0 %v951, 15
        %v957 = vpop.permute.xlu0 %956
        %v958 = vrot.slane %v955, 4
        %v959 = vrot.slane %v957, 4
        %v960 = vsel %vm449, %v958, %v959
        %v961 = vsel %vm513, %v955, %v960
        %963 = vst [vmem:[#allocation3 + $0x58] sm:$0xff] %v961
        %v964 = vld [vmem:[#allocation2 + $0x10] sm:$0xff]
        %v965 = vld [vmem:[#allocation2 + $0x18] sm:$0xf]
        %v966 = vunpack.c.l.bf16 %v964
        %v967 = vunpack.c.h.bf16 %v964
        %v968 = vunpack.c.l.bf16 %v965
        %v969 = vmul.f32 %v966, %v523
        %v970 = vmul.f32 %v967, %v527
        %v971 = vmul.f32 %v968, %v525
        %v972 = vpack.c.bf16 %v970, %v969
        %v973 = vpack.c.bf16 %v971, %v971
        %976 = vrot.lane.b32.xlu0 %v972, 1
        %v977 = vpop.permute.xlu0 %976
        %978 = vrot.lane.b32.xlu0 %v973, 1
        %v979 = vpop.permute.xlu0 %978
        %v980 = vrot.slane %v977, 4
        %v981 = vrot.slane %v979, 4
        %v982 = vsel %vm449, %v980, %v981
        %v983 = vsel %vm545, %v977, %v982
        %985 = vst [vmem:[#allocation3 + $0x60] sm:$0xff] %v983
        %v986 = vld [vmem:[#allocation2 + $0x14] sm:$0xff]
        %987 = vst [vmem:[#allocation3 + $0x68] sm:$0xff] %v986
        %v988 = vld [vmem:[#allocation2 + $0x14] sm:$0xff]
        %v989 = vld [vmem:[#allocation2 + $0x1c] sm:$0xf]
        %v990 = vunpack.c.l.bf16 %v988
        %v991 = vunpack.c.h.bf16 %v988
        %v992 = vunpack.c.l.bf16 %v989
        %v993 = vmul.f32 %v990, %v557
        %v994 = vmul.f32 %v991, %v561
        %v995 = vmul.f32 %v992, %v559
        %v996 = vpack.c.bf16 %v994, %v993
        %v997 = vpack.c.bf16 %v995, %v995
        %1000 = vrot.lane.b32.xlu0 %v996, 127
        %v1001 = vpop.permute.xlu0 %1000
        %1002 = vrot.lane.b32.xlu0 %v997, 127
        %v1003 = vpop.permute.xlu0 %1002
        %v1004 = vrot.slane %v1001, 4
        %v1005 = vrot.slane %v1003, 4
        %v1006 = vsel %vm449, %v1004, %v1005
        %v1007 = vsel %vm579, %v1001, %v1006
        %1009 = vst [vmem:[#allocation3 + $0x70] sm:$0xff] %v1007
        %v1010 = vld [vmem:[#allocation2 + $0x14] sm:$0xff]
        %v1011 = vld [vmem:[#allocation2 + $0x1c] sm:$0xf]
        %v1012 = vunpack.c.l.bf16 %v1010
        %v1013 = vunpack.c.h.bf16 %v1010
        %v1014 = vunpack.c.l.bf16 %v1011
        %v1015 = vmul.f32 %v1012, %v589
        %v1016 = vmul.f32 %v1013, %v593
        %v1017 = vmul.f32 %v1014, %v591
        %v1018 = vpack.c.bf16 %v1016, %v1015
        %v1019 = vpack.c.bf16 %v1017, %v1017
        %1022 = vrot.lane.b32.xlu0 %v1018, 113
        %v1023 = vpop.permute.xlu0 %1022
        %1024 = vrot.lane.b32.xlu0 %v1019, 113
        %v1025 = vpop.permute.xlu0 %1024
        %v1026 = vrot.slane %v1023, 4
        %v1027 = vrot.slane %v1025, 4
        %v1028 = vsel %vm449, %v1026, %v1027
        %v1029 = vsel %vm611, %v1023, %v1028
        %1031 = vst [vmem:[#allocation3 + $0x78] sm:$0xff] %v1029
        %v1032 = vld [vmem:[#allocation2 + $0x14] sm:$0xff]
        %v1033 = vld [vmem:[#allocation2 + $0x1c] sm:$0xf]
        %1036 = vrot.lane.b32.xlu0 %v1032, 112
        %v1037 = vpop.permute.xlu0 %1036
        %1038 = vrot.lane.b32.xlu0 %v1033, 112
        %v1039 = vpop.permute.xlu0 %1038
        %v1040 = vrot.slane %v1037, 4
        %v1041 = vrot.slane %v1039, 4
        %v1042 = vsel %vm449, %v1040, %v1041
        %v1043 = vsel %vm626, %v1037, %v1042
        %1045 = vst [vmem:[#allocation3 + $0x80] sm:$0xff] %v1043
        %v1046 = vld [vmem:[#allocation2 + $0x14] sm:$0xff]
        %v1047 = vld [vmem:[#allocation2 + $0x1c] sm:$0xf]
        %v1048 = vunpack.c.l.bf16 %v1046
        %v1049 = vunpack.c.h.bf16 %v1046
        %v1050 = vunpack.c.l.bf16 %v1047
        %v1051 = vmul.f32 %v1048, %v636
        %v1052 = vmul.f32 %v1049, %v640
        %v1053 = vmul.f32 %v1050, %v638
        %v1054 = vpack.c.bf16 %v1052, %v1051
        %v1055 = vpack.c.bf16 %v1053, %v1053
        %1058 = vrot.lane.b32.xlu0 %v1054, 111
        %v1059 = vpop.permute.xlu0 %1058
        %1060 = vrot.lane.b32.xlu0 %v1055, 111
        %v1061 = vpop.permute.xlu0 %1060
        %v1062 = vrot.slane %v1059, 4
        %v1063 = vrot.slane %v1061, 4
        %v1064 = vsel %vm449, %v1062, %v1063
        %v1065 = vsel %vm658, %v1059, %v1064
        %1067 = vst [vmem:[#allocation3 + $0x88] sm:$0xff] %v1065
        %v1068 = vld [vmem:[#allocation10] sm:$0xf]
        %v1069 = vld [vmem:[#allocation10 + $0x4] sm:$0xf]
        %v1070 = vld [vmem:[#allocation10 + $0x8] sm:$0xf]
        %v1071 = vld [vmem:[#allocation3 + $0x48] sm:$0xff]
        %v1072 = vld [vmem:[#allocation3 + $0x50] sm:$0xff]
        %v1073 = vld [vmem:[#allocation3 + $0x58] sm:$0xff]
        %v1074 = vld [vmem:[#allocation3 + $0x60] sm:$0xff]
        %v1075 = vld [vmem:[#allocation3 + $0x68] sm:$0xff]
        %v1076 = vld [vmem:[#allocation3 + $0x70] sm:$0xff]
        %v1077 = vld [vmem:[#allocation3 + $0x78] sm:$0xff]
        %v1078 = vld [vmem:[#allocation3 + $0x80] sm:$0xff]
        %v1079 = vld [vmem:[#allocation3 + $0x88] sm:$0xff]
        %v1083 = vunpack.c.l.b16 %v1068
        %v1084 = vunpack.c.l.b16 %v1069
        %v1085 = vunpack.c.l.b16 %v1070
        %v1086 = vpack.c.b16 %v1084, %v1083
        %v1087 = vpack.c.b16 %v1085, %v1085
        %v1097 = vunpack.c.l.b16 %v1071
        %v1098 = vunpack.c.h.b16 %v1071
        %v1099 = vunpack.c.l.b16 %v1072
        %v1100 = vunpack.c.h.b16 %v1072
        %v1101 = vunpack.c.l.b16 %v1073
        %v1102 = vunpack.c.h.b16 %v1073
        %v1103 = vunpack.c.l.b16 %v1074
        %v1104 = vunpack.c.h.b16 %v1074
        %v1105 = vunpack.c.l.b16 %v1075
        %v1106 = vunpack.c.h.b16 %v1075
        %v1107 = vunpack.c.l.b16 %v1076
        %v1108 = vunpack.c.h.b16 %v1076
        %v1109 = vunpack.c.l.b16 %v1077
        %v1110 = vunpack.c.h.b16 %v1077
        %v1111 = vunpack.c.l.b16 %v1078
        %v1112 = vunpack.c.h.b16 %v1078
        %v1113 = vunpack.c.l.b16 %v1079
        %v1114 = vunpack.c.h.b16 %v1079
        %v1115 = vpack.c.b16 %v1099, %v1097
        %v1116 = vpack.c.b16 %v1100, %v1098
        %v1117 = vpack.c.b16 %v1103, %v1101
        %v1118 = vpack.c.b16 %v1104, %v1102
        %v1119 = vpack.c.b16 %v1107, %v1105
        %v1120 = vpack.c.b16 %v1108, %v1106
        %v1121 = vpack.c.b16 %v1111, %v1109
        %v1122 = vpack.c.b16 %v1112, %v1110
        %v1123 = vpack.c.b16 %v1113, %v1113
        %v1124 = vpack.c.b16 %v1114, %v1114
        %v1134 = vsel %vm754, %v1086, 0
        %v1137 = vsel %vm754, %v1087, 0
        %v1140 = vsel %vm761, %v1123, 0
        %v1143 = vsel %vm761, %v1124, 0
        %1145 = vmatpush.bf16.msra.mxu0 0
        %1146 = vmatpush.bf16.msra.mxu0 0
        %1147 = vmatpush.bf16.msra.mxu0 0
        %1148 = vmatpush.bf16.msra.mxu0 %v1140
        %1149 = vmatpush.bf16.msra.mxu0 %v1121
        %1150 = vmatpush.bf16.msra.mxu0 %v1119
        %1151 = vmatpush.bf16.msra.mxu0 %v1117
        %1152 = vmatpush.bf16.msra.mxu0 %v1115
        %1153 = vmatmul.bf16.gmra.mxu0 %v1134
        %v1154 = vpop.f32.mrf.mxu0
        %v1155 = vadd.f32 0.0, %v1154
        %v1156 = vpop.f32.mrf.mxu0
        %v1157 = vadd.f32 0.0, %v1156
        %1158 = vmatmul.bf16.gmra.mxu0 %v1137
        %v1159 = vpop.f32.mrf.mxu0
        %v1160 = vadd.f32 0.0, %v1159
        %v1161 = vpop.f32.mrf.mxu0
        %1162 = vdwg.mxu0
        %1163 = vmatpush.bf16.msra.mxu0 0
        %1164 = vmatpush.bf16.msra.mxu0 0
        %1165 = vmatpush.bf16.msra.mxu0 0
        %1166 = vmatpush.bf16.msra.mxu0 %v1143
        %1167 = vmatpush.bf16.msra.mxu0 %v1122
        %1168 = vmatpush.bf16.msra.mxu0 %v1120
        %1169 = vmatpush.bf16.msra.mxu0 %v1118
        %1170 = vmatpush.bf16.msra.mxu0 %v1116
        %1171 = vmatmul.bf16.gmra.mxu0 %v1134
        %v1172 = vpop.f32.mrf.mxu0
        %v1173 = vadd.f32 0.0, %v1172
        %v1174 = vpop.f32.mrf.mxu0
        %v1175 = vadd.f32 0.0, %v1174
        %1176 = vmatmul.bf16.gmra.mxu0 %v1137
        %v1177 = vpop.f32.mrf.mxu0
        %v1178 = vadd.f32 0.0, %v1177
        %v1179 = vpop.f32.mrf.mxu0
        %1180 = vdwg.mxu0
        %v1181 = vld [vmem:[#allocation4 + $0x10] sm:$0xff]
        %v1182 = vld [vmem:[#allocation4 + $0x18] sm:$0xff]
        %v1183 = vld [vmem:[#allocation4 + $0x20] sm:$0xff]
        %v1184 = vld [vmem:[#allocation4 + $0x28] sm:$0xff]
        %v1185 = vld [vmem:[#allocation4 + $0x30] sm:$0xff]
        %v1186 = vld [vmem:[#allocation4 + $0x38] sm:$0xff]
        %v1187 = vadd.f32 %v1181, %v1155
        %v1188 = vadd.f32 %v1182, %v1173
        %v1189 = vadd.f32 %v1183, %v1157
        %v1190 = vadd.f32 %v1184, %v1175
        %v1191 = vadd.f32 %v1185, %v1160
        %v1192 = vadd.f32 %v1186, %v1178
        %1193 = vst [vmem:[#allocation4 + $0x10] sm:$0xff] %v1187
        %1194 = vst [vmem:[#allocation4 + $0x18] sm:$0xff] %v1188
        %1195 = vst [vmem:[#allocation4 + $0x20] sm:$0xff] %v1189
        %1196 = vst [vmem:[#allocation4 + $0x28] sm:$0xff] %v1190
        %1197 = vst [vmem:[#allocation4 + $0x30] sm:$0xff] %v1191
        %1198 = vst [vmem:[#allocation4 + $0x38] sm:$0xff] %v1192
        %v1199 = vld [vmem:[#allocation4 + $0x10] sm:$0xff]
        %v1200 = vld [vmem:[#allocation4 + $0x18] sm:$0xff]
        %v1201 = vmul.f32 %v1199, 0.5
        %v1202 = vmul.f32 %v1200, 0.5
        %v1203 = vmul.f32 %v1199, 0.70710677
        %v1204 = vmul.f32 %v1200, 0.70710677
        %v1205 = vmul.f32 %v1203, %v1203
        %v1206 = vmin.f32 16.0, %v1205
        %v1207 = vmul.f32 %v1206, 2.1237322e-06
        %v1208 = vadd.f32 %v1207, 0.00028619796
        %v1209 = vmul.f32 %v1206, %v1208
        %v1210 = vadd.f32 %v1209, 0.0036580483
        %v1211 = vmul.f32 %v1206, %v1210
        %v1212 = vadd.f32 %v1211, 0.05243302
        %v1213 = vmul.f32 %v1206, %v1212
        %v1214 = vadd.f32 %v1213, 0.18741608
        %v1215 = vmul.f32 %v1206, %v1214
        %v1216 = vadd.f32 %v1215, 1.1283791
        %v1217 = vmul.f32 %v1203, %v1216
        %v1218 = vmul.f32 %v1206, 3.8918573e-05
        %v1219 = vadd.f32 %v1218, 0.001143296
        %v1220 = vmul.f32 %v1206, %v1219
        %v1221 = vadd.f32 %v1220, 0.014752088
        %v1222 = vmul.f32 %v1206, %v1221
        %v1223 = vadd.f32 %v1222, 0.112945676
        %v1224 = vmul.f32 %v1206, %v1223
        %v1225 = vadd.f32 %v1224, 0.4994258
        %v1226 = vmul.f32 %v1206, %v1225
        %v1227 = vadd.f32 %v1226, 1.0
        %v1228 = vrcp.pop %v1227
        %v1229 = vmul.f32 %v1227, %v1228
        %v1230 = vsub.f32 1.0, %v1229
        %v1231 = vmul.f32 %v1228, %v1230
        %v1232 = vadd.f32 %v1228, %v1231
        %vm1233 = vweird.f32 %v1227
        %vm1234 = vweird.f32 %v1228
        %vm1235 = vmor %vm1233, %vm1234
        %v1236 = vsel %vm1235, %v1228, %v1232
        %v1237 = vand.u32 2147483647, %v1227
        %vm1238 = vcmp.eq.f32.partialorder %v1237, 8.507059e+37
        %v1239 = vand.u32 %v1227, 2147483648
        %v1240 = vor.u32 1.1754944e-38, %v1239
        %v1241 = vsel %vm1238, %v1240, %v1236
        %v1242 = vmul.f32 %v1217, %v1241
        %v1243 = vmin.f32 %v1242, 1.0
        %v1244 = vmax.f32 %v1243, -1.0
        %v1245 = vmul.f32 %v1204, %v1204
        %v1246 = vmin.f32 16.0, %v1245
        %v1247 = vmul.f32 %v1246, 2.1237322e-06
        %v1248 = vadd.f32 %v1247, 0.00028619796
        %v1249 = vmul.f32 %v1246, %v1248
        %v1250 = vadd.f32 %v1249, 0.0036580483
        %v1251 = vmul.f32 %v1246, %v1250
        %v1252 = vadd.f32 %v1251, 0.05243302
        %v1253 = vmul.f32 %v1246, %v1252
        %v1254 = vadd.f32 %v1253, 0.18741608
        %v1255 = vmul.f32 %v1246, %v1254
        %v1256 = vadd.f32 %v1255, 1.1283791
        %v1257 = vmul.f32 %v1204, %v1256
        %v1258 = vmul.f32 %v1246, 3.8918573e-05
        %v1259 = vadd.f32 %v1258, 0.001143296
        %v1260 = vmul.f32 %v1246, %v1259
        %v1261 = vadd.f32 %v1260, 0.014752088
        %v1262 = vmul.f32 %v1246, %v1261
        %v1263 = vadd.f32 %v1262, 0.112945676
        %v1264 = vmul.f32 %v1246, %v1263
        %v1265 = vadd.f32 %v1264, 0.4994258
        %v1266 = vmul.f32 %v1246, %v1265
        %v1267 = vadd.f32 %v1266, 1.0
        %v1268 = vrcp.pop %v1267
        %v1269 = vmul.f32 %v1267, %v1268
        %v1270 = vsub.f32 1.0, %v1269
        %v1271 = vmul.f32 %v1268, %v1270
        %v1272 = vadd.f32 %v1268, %v1271
        %vm1273 = vweird.f32 %v1267
        %vm1274 = vweird.f32 %v1268
        %vm1275 = vmor %vm1273, %vm1274
        %v1276 = vsel %vm1275, %v1268, %v1272
        %v1277 = vand.u32 2147483647, %v1267
        %vm1278 = vcmp.eq.f32.partialorder %v1277, 8.507059e+37
        %v1279 = vand.u32 %v1267, 2147483648
        %v1280 = vor.u32 1.1754944e-38, %v1279
        %v1281 = vsel %vm1278, %v1280, %v1276
        %v1282 = vmul.f32 %v1257, %v1281
        %v1283 = vmin.f32 %v1282, 1.0
        %v1284 = vmax.f32 %v1283, -1.0
        %v1285 = vadd.f32 %v1244, 1.0
        %v1286 = vadd.f32 %v1284, 1.0
        %v1287 = vmul.f32 %v1201, %v1285
        %v1288 = vmul.f32 %v1202, %v1286
        %v1289 = vpack.c.bf16 %v1288, %v1287
        %1290 = vst [vmem:[#allocation2 + $0x24] sm:$0xff] %v1289
        %v1291 = vld [vmem:[#allocation2 + $0x20] sm:$0xff]
        %v1292 = vld [vmem:[#allocation2 + $0x28] sm:$0xf]
        %v1293 = vunpack.c.l.bf16 %v1291
        %v1294 = vunpack.c.h.bf16 %v1291
        %v1295 = vunpack.c.l.bf16 %v1292
        %v1296 = vmul.f32 %v1293, %v428
        %v1297 = vmul.f32 %v1294, %v432
        %v1298 = vmul.f32 %v1295, %v430
        %v1299 = vpack.c.bf16 %v1297, %v1296
        %v1300 = vpack.c.bf16 %v1298, %v1298
        %1303 = vrot.lane.b32.xlu0 %v1299, 17
        %v1304 = vpop.permute.xlu0 %1303
        %1305 = vrot.lane.b32.xlu0 %v1300, 17
        %v1306 = vpop.permute.xlu0 %1305
        %v1307 = vrot.slane %v1304, 4
        %v1308 = vrot.slane %v1306, 4
        %v1309 = vsel %vm449, %v1307, %v1308
        %v1310 = vsel %vm451, %v1304, %v1309
        %1312 = vst [vmem:[#allocation3 + $0x90] sm:$0xff] %v1310
        %v1313 = vld [vmem:[#allocation2 + $0x20] sm:$0xff]
        %v1314 = vld [vmem:[#allocation2 + $0x28] sm:$0xf]
        %1317 = vrot.lane.b32.xlu0 %v1313, 16
        %v1318 = vpop.permute.xlu0 %1317
        %1319 = vrot.lane.b32.xlu0 %v1314, 16
        %v1320 = vpop.permute.xlu0 %1319
        %v1321 = vrot.slane %v1318, 4
        %v1322 = vrot.slane %v1320, 4
        %v1323 = vsel %vm449, %v1321, %v1322
        %v1324 = vsel %vm466, %v1318, %v1323
        %1326 = vst [vmem:[#allocation3 + $0x98] sm:$0xff] %v1324
        %v1327 = vld [vmem:[#allocation2 + $0x20] sm:$0xff]
        %v1328 = vld [vmem:[#allocation2 + $0x28] sm:$0xf]
        %v1329 = vunpack.c.l.bf16 %v1327
        %v1330 = vunpack.c.h.bf16 %v1327
        %v1331 = vunpack.c.l.bf16 %v1328
        %v1332 = vmul.f32 %v1329, %v491
        %v1333 = vmul.f32 %v1330, %v495
        %v1334 = vmul.f32 %v1331, %v493
        %v1335 = vpack.c.bf16 %v1333, %v1332
        %v1336 = vpack.c.bf16 %v1334, %v1334
        %1339 = vrot.lane.b32.xlu0 %v1335, 15
        %v1340 = vpop.permute.xlu0 %1339
        %1341 = vrot.lane.b32.xlu0 %v1336, 15
        %v1342 = vpop.permute.xlu0 %1341
        %v1343 = vrot.slane %v1340, 4
        %v1344 = vrot.slane %v1342, 4
        %v1345 = vsel %vm449, %v1343, %v1344
        %v1346 = vsel %vm513, %v1340, %v1345
        %1348 = vst [vmem:[#allocation3 + $0xa0] sm:$0xff] %v1346
        %v1349 = vld [vmem:[#allocation2 + $0x20] sm:$0xff]
        %v1350 = vld [vmem:[#allocation2 + $0x28] sm:$0xf]
        %v1351 = vunpack.c.l.bf16 %v1349
        %v1352 = vunpack.c.h.bf16 %v1349
        %v1353 = vunpack.c.l.bf16 %v1350
        %v1354 = vmul.f32 %v1351, %v523
        %v1355 = vmul.f32 %v1352, %v527
        %v1356 = vmul.f32 %v1353, %v525
        %v1357 = vpack.c.bf16 %v1355, %v1354
        %v1358 = vpack.c.bf16 %v1356, %v1356
        %1361 = vrot.lane.b32.xlu0 %v1357, 1
        %v1362 = vpop.permute.xlu0 %1361
        %1363 = vrot.lane.b32.xlu0 %v1358, 1
        %v1364 = vpop.permute.xlu0 %1363
        %v1365 = vrot.slane %v1362, 4
        %v1366 = vrot.slane %v1364, 4
        %v1367 = vsel %vm449, %v1365, %v1366
        %v1368 = vsel %vm545, %v1362, %v1367
        %1370 = vst [vmem:[#allocation3 + $0xa8] sm:$0xff] %v1368
        %v1371 = vld [vmem:[#allocation2 + $0x24] sm:$0xff]
        %1372 = vst [vmem:[#allocation3 + $0xb0] sm:$0xff] %v1371
        %v1373 = vld [vmem:[#allocation2 + $0x24] sm:$0xff]
        %v1374 = vld [vmem:[#allocation2 + $0x2c] sm:$0xf]
        %v1375 = vunpack.c.l.bf16 %v1373
        %v1376 = vunpack.c.h.bf16 %v1373
        %v1377 = vunpack.c.l.bf16 %v1374
        %v1378 = vmul.f32 %v1375, %v557
        %v1379 = vmul.f32 %v1376, %v561
        %v1380 = vmul.f32 %v1377, %v559
        %v1381 = vpack.c.bf16 %v1379, %v1378
        %v1382 = vpack.c.bf16 %v1380, %v1380
        %1385 = vrot.lane.b32.xlu0 %v1381, 127
        %v1386 = vpop.permute.xlu0 %1385
        %1387 = vrot.lane.b32.xlu0 %v1382, 127
        %v1388 = vpop.permute.xlu0 %1387
        %v1389 = vrot.slane %v1386, 4
        %v1390 = vrot.slane %v1388, 4
        %v1391 = vsel %vm449, %v1389, %v1390
        %v1392 = vsel %vm579, %v1386, %v1391
        %1394 = vst [vmem:[#allocation3 + $0xb8] sm:$0xff] %v1392
        %v1395 = vld [vmem:[#allocation2 + $0x24] sm:$0xff]
        %v1396 = vld [vmem:[#allocation2 + $0x2c] sm:$0xf]
        %v1397 = vunpack.c.l.bf16 %v1395
        %v1398 = vunpack.c.h.bf16 %v1395
        %v1399 = vunpack.c.l.bf16 %v1396
        %v1400 = vmul.f32 %v1397, %v589
        %v1401 = vmul.f32 %v1398, %v593
        %v1402 = vmul.f32 %v1399, %v591
        %v1403 = vpack.c.bf16 %v1401, %v1400
        %v1404 = vpack.c.bf16 %v1402, %v1402
        %1407 = vrot.lane.b32.xlu0 %v1403, 113
        %v1408 = vpop.permute.xlu0 %1407
        %1409 = vrot.lane.b32.xlu0 %v1404, 113
        %v1410 = vpop.permute.xlu0 %1409
        %v1411 = vrot.slane %v1408, 4
        %v1412 = vrot.slane %v1410, 4
        %v1413 = vsel %vm449, %v1411, %v1412
        %v1414 = vsel %vm611, %v1408, %v1413
        %1416 = vst [vmem:[#allocation3 + $0xc0] sm:$0xff] %v1414
        %v1417 = vld [vmem:[#allocation2 + $0x24] sm:$0xff]
        %v1418 = vld [vmem:[#allocation2 + $0x2c] sm:$0xf]
        %1421 = vrot.lane.b32.xlu0 %v1417, 112
        %v1422 = vpop.permute.xlu0 %1421
        %1423 = vrot.lane.b32.xlu0 %v1418, 112
        %v1424 = vpop.permute.xlu0 %1423
        %v1425 = vrot.slane %v1422, 4
        %v1426 = vrot.slane %v1424, 4
        %v1427 = vsel %vm449, %v1425, %v1426
        %v1428 = vsel %vm626, %v1422, %v1427
        %1430 = vst [vmem:[#allocation3 + $0xc8] sm:$0xff] %v1428
        %v1431 = vld [vmem:[#allocation2 + $0x24] sm:$0xff]
        %v1432 = vld [vmem:[#allocation2 + $0x2c] sm:$0xf]
        %v1433 = vunpack.c.l.bf16 %v1431
        %v1434 = vunpack.c.h.bf16 %v1431
        %v1435 = vunpack.c.l.bf16 %v1432
        %v1436 = vmul.f32 %v1433, %v636
        %v1437 = vmul.f32 %v1434, %v640
        %v1438 = vmul.f32 %v1435, %v638
        %v1439 = vpack.c.bf16 %v1437, %v1436
        %v1440 = vpack.c.bf16 %v1438, %v1438
        %1443 = vrot.lane.b32.xlu0 %v1439, 111
        %v1444 = vpop.permute.xlu0 %1443
        %1445 = vrot.lane.b32.xlu0 %v1440, 111
        %v1446 = vpop.permute.xlu0 %1445
        %v1447 = vrot.slane %v1444, 4
        %v1448 = vrot.slane %v1446, 4
        %v1449 = vsel %vm449, %v1447, %v1448
        %v1450 = vsel %vm658, %v1444, %v1449
        %1452 = vst [vmem:[#allocation3 + $0xd0] sm:$0xff] %v1450
        %v1453 = vld [vmem:[%s5] sm:$0xf]
        %v1454 = vld [vmem:[%s5 + $0x4] sm:$0xf]
        %v1455 = vld [vmem:[#allocation3 + $0x90] sm:$0xff]
        %v1456 = vld [vmem:[#allocation3 + $0x98] sm:$0xff]
        %v1457 = vld [vmem:[#allocation3 + $0xa0] sm:$0xff]
        %v1458 = vld [vmem:[#allocation3 + $0xa8] sm:$0xff]
        %v1459 = vld [vmem:[#allocation3 + $0xb0] sm:$0xff]
        %v1460 = vld [vmem:[#allocation3 + $0xb8] sm:$0xff]
        %v1461 = vld [vmem:[#allocation3 + $0xc0] sm:$0xff]
        %v1462 = vld [vmem:[#allocation3 + $0xc8] sm:$0xff]
        %v1463 = vld [vmem:[#allocation3 + $0xd0] sm:$0xff]
        %v1466 = vunpack.c.l.b16 %v1453
        %v1467 = vunpack.c.l.b16 %v1454
        %v1468 = vpack.c.b16 %v1467, %v1466
        %v1478 = vunpack.c.l.b16 %v1455
        %v1479 = vunpack.c.h.b16 %v1455
        %v1480 = vunpack.c.l.b16 %v1456
        %v1481 = vunpack.c.h.b16 %v1456
        %v1482 = vunpack.c.l.b16 %v1457
        %v1483 = vunpack.c.h.b16 %v1457
        %v1484 = vunpack.c.l.b16 %v1458
        %v1485 = vunpack.c.h.b16 %v1458
        %v1486 = vunpack.c.l.b16 %v1459
        %v1487 = vunpack.c.h.b16 %v1459
        %v1488 = vunpack.c.l.b16 %v1460
        %v1489 = vunpack.c.h.b16 %v1460
        %v1490 = vunpack.c.l.b16 %v1461
        %v1491 = vunpack.c.h.b16 %v1461
        %v1492 = vunpack.c.l.b16 %v1462
        %v1493 = vunpack.c.h.b16 %v1462
        %v1494 = vunpack.c.l.b16 %v1463
        %v1495 = vunpack.c.h.b16 %v1463
        %v1496 = vpack.c.b16 %v1480, %v1478
        %v1497 = vpack.c.b16 %v1481, %v1479
        %v1498 = vpack.c.b16 %v1484, %v1482
        %v1499 = vpack.c.b16 %v1485, %v1483
        %v1500 = vpack.c.b16 %v1488, %v1486
        %v1501 = vpack.c.b16 %v1489, %v1487
        %v1502 = vpack.c.b16 %v1492, %v1490
        %v1503 = vpack.c.b16 %v1493, %v1491
        %v1504 = vpack.c.b16 %v1494, %v1494
        %v1505 = vpack.c.b16 %v1495, %v1495
        %v1515 = vsel %vm754, %v1468, 0
        %v1518 = vsel %vm761, %v1504, 0
        %v1521 = vsel %vm761, %v1505, 0
        %1523 = vmatpush.bf16.msra.mxu0 0
        %1524 = vmatpush.bf16.msra.mxu0 0
        %1525 = vmatpush.bf16.msra.mxu0 0
        %1526 = vmatpush.bf16.msra.mxu0 %v1518
        %1527 = vmatpush.bf16.msra.mxu0 %v1502
        %1528 = vmatpush.bf16.msra.mxu0 %v1500
        %1529 = vmatpush.bf16.msra.mxu0 %v1498
        %1530 = vmatpush.bf16.msra.mxu0 %v1496
        %1531 = vmatmul.bf16.gmra.mxu0 %v1515
        %v1532 = vpop.f32.mrf.mxu0
        %v1533 = vadd.f32 0.0, %v1532
        %v1534 = vpop.f32.mrf.mxu0
        %v1535 = vadd.f32 0.0, %v1534
        %1536 = vdwg.mxu0
        %1537 = vmatpush.bf16.msra.mxu0 0
        %1538 = vmatpush.bf16.msra.mxu0 0
        %1539 = vmatpush.bf16.msra.mxu0 0
        %1540 = vmatpush.bf16.msra.mxu0 %v1521
        %1541 = vmatpush.bf16.msra.mxu0 %v1503
        %1542 = vmatpush.bf16.msra.mxu0 %v1501
        %1543 = vmatpush.bf16.msra.mxu0 %v1499
        %1544 = vmatpush.bf16.msra.mxu0 %v1497
        %1545 = vmatmul.bf16.gmra.mxu0 %v1515
        %v1546 = vpop.f32.mrf.mxu0
        %v1547 = vadd.f32 0.0, %v1546
        %v1548 = vpop.f32.mrf.mxu0
        %v1549 = vadd.f32 0.0, %v1548
        %1550 = vdwg.mxu0
        %v1551 = vld [vmem:[#allocation4 + $0x20] sm:$0xff]
        %v1552 = vld [vmem:[#allocation4 + $0x28] sm:$0xff]
        %v1553 = vld [vmem:[#allocation4 + $0x30] sm:$0xff]
        %v1554 = vld [vmem:[#allocation4 + $0x38] sm:$0xff]
        %v1555 = vadd.f32 %v1551, %v1533
        %v1556 = vadd.f32 %v1552, %v1547
        %v1557 = vadd.f32 %v1553, %v1535
        %v1558 = vadd.f32 %v1554, %v1549
        %1559 = vst [vmem:[#allocation4 + $0x20] sm:$0xff] %v1555
        %1560 = vst [vmem:[#allocation4 + $0x28] sm:$0xff] %v1556
        %1561 = vst [vmem:[#allocation4 + $0x30] sm:$0xff] %v1557
        %1562 = vst [vmem:[#allocation4 + $0x38] sm:$0xff] %v1558
        %v1563 = vld [vmem:[#allocation4 + $0x20] sm:$0xff]
        %v1564 = vld [vmem:[#allocation4 + $0x28] sm:$0xff]
        %v1565 = vmul.f32 %v1563, 0.5
        %v1566 = vmul.f32 %v1564, 0.5
        %v1567 = vmul.f32 %v1563, 0.70710677
        %v1568 = vmul.f32 %v1564, 0.70710677
        %v1569 = vmul.f32 %v1567, %v1567
        %v1570 = vmin.f32 16.0, %v1569
        %v1571 = vmul.f32 %v1570, 2.1237322e-06
        %v1572 = vadd.f32 %v1571, 0.00028619796
        %v1573 = vmul.f32 %v1570, %v1572
        %v1574 = vadd.f32 %v1573, 0.0036580483
        %v1575 = vmul.f32 %v1570, %v1574
        %v1576 = vadd.f32 %v1575, 0.05243302
        %v1577 = vmul.f32 %v1570, %v1576
        %v1578 = vadd.f32 %v1577, 0.18741608
        %v1579 = vmul.f32 %v1570, %v1578
        %v1580 = vadd.f32 %v1579, 1.1283791
        %v1581 = vmul.f32 %v1567, %v1580
        %v1582 = vmul.f32 %v1570, 3.8918573e-05
        %v1583 = vadd.f32 %v1582, 0.001143296
        %v1584 = vmul.f32 %v1570, %v1583
        %v1585 = vadd.f32 %v1584, 0.014752088
        %v1586 = vmul.f32 %v1570, %v1585
        %v1587 = vadd.f32 %v1586, 0.112945676
        %v1588 = vmul.f32 %v1570, %v1587
        %v1589 = vadd.f32 %v1588, 0.4994258
        %v1590 = vmul.f32 %v1570, %v1589
        %v1591 = vadd.f32 %v1590, 1.0
        %v1592 = vrcp.pop %v1591
        %v1593 = vmul.f32 %v1591, %v1592
        %v1594 = vsub.f32 1.0, %v1593
        %v1595 = vmul.f32 %v1592, %v1594
        %v1596 = vadd.f32 %v1592, %v1595
        %vm1597 = vweird.f32 %v1591
        %vm1598 = vweird.f32 %v1592
        %vm1599 = vmor %vm1597, %vm1598
        %v1600 = vsel %vm1599, %v1592, %v1596
        %v1601 = vand.u32 2147483647, %v1591
        %vm1602 = vcmp.eq.f32.partialorder %v1601, 8.507059e+37
        %v1603 = vand.u32 %v1591, 2147483648
        %v1604 = vor.u32 1.1754944e-38, %v1603
        %v1605 = vsel %vm1602, %v1604, %v1600
        %v1606 = vmul.f32 %v1581, %v1605
        %v1607 = vmin.f32 %v1606, 1.0
        %v1608 = vmax.f32 %v1607, -1.0
        %v1609 = vmul.f32 %v1568, %v1568
        %v1610 = vmin.f32 16.0, %v1609
        %v1611 = vmul.f32 %v1610, 2.1237322e-06
        %v1612 = vadd.f32 %v1611, 0.00028619796
        %v1613 = vmul.f32 %v1610, %v1612
        %v1614 = vadd.f32 %v1613, 0.0036580483
        %v1615 = vmul.f32 %v1610, %v1614
        %v1616 = vadd.f32 %v1615, 0.05243302
        %v1617 = vmul.f32 %v1610, %v1616
        %v1618 = vadd.f32 %v1617, 0.18741608
        %v1619 = vmul.f32 %v1610, %v1618
        %v1620 = vadd.f32 %v1619, 1.1283791
        %v1621 = vmul.f32 %v1568, %v1620
        %v1622 = vmul.f32 %v1610, 3.8918573e-05
        %v1623 = vadd.f32 %v1622, 0.001143296
        %v1624 = vmul.f32 %v1610, %v1623
        %v1625 = vadd.f32 %v1624, 0.014752088
        %v1626 = vmul.f32 %v1610, %v1625
        %v1627 = vadd.f32 %v1626, 0.112945676
        %v1628 = vmul.f32 %v1610, %v1627
        %v1629 = vadd.f32 %v1628, 0.4994258
        %v1630 = vmul.f32 %v1610, %v1629
        %v1631 = vadd.f32 %v1630, 1.0
        %v1632 = vrcp.pop %v1631
        %v1633 = vmul.f32 %v1631, %v1632
        %v1634 = vsub.f32 1.0, %v1633
        %v1635 = vmul.f32 %v1632, %v1634
        %v1636 = vadd.f32 %v1632, %v1635
        %vm1637 = vweird.f32 %v1631
        %vm1638 = vweird.f32 %v1632
        %vm1639 = vmor %vm1637, %vm1638
        %v1640 = vsel %vm1639, %v1632, %v1636
        %v1641 = vand.u32 2147483647, %v1631
        %vm1642 = vcmp.eq.f32.partialorder %v1641, 8.507059e+37
        %v1643 = vand.u32 %v1631, 2147483648
        %v1644 = vor.u32 1.1754944e-38, %v1643
        %v1645 = vsel %vm1642, %v1644, %v1640
        %v1646 = vmul.f32 %v1621, %v1645
        %v1647 = vmin.f32 %v1646, 1.0
        %v1648 = vmax.f32 %v1647, -1.0
        %v1649 = vadd.f32 %v1608, 1.0
        %v1650 = vadd.f32 %v1648, 1.0
        %v1651 = vmul.f32 %v1565, %v1649
        %v1652 = vmul.f32 %v1566, %v1650
        %v1653 = vpack.c.bf16 %v1652, %v1651
        %1654 = vst [vmem:[#allocation2 + $0x34] sm:$0xff] %v1653
        %v1655 = vld [vmem:[#allocation2 + $0x30] sm:$0xff]
        %v1656 = vld [vmem:[#allocation2 + $0x38] sm:$0xf]
        %v1657 = vunpack.c.l.bf16 %v1655
        %v1658 = vunpack.c.h.bf16 %v1655
        %v1659 = vunpack.c.l.bf16 %v1656
        %v1660 = vmul.f32 %v1657, %v428
        %v1661 = vmul.f32 %v1658, %v432
        %v1662 = vmul.f32 %v1659, %v430
        %v1663 = vpack.c.bf16 %v1661, %v1660
        %v1664 = vpack.c.bf16 %v1662, %v1662
        %1667 = vrot.lane.b32.xlu0 %v1663, 17
        %v1668 = vpop.permute.xlu0 %1667
        %1669 = vrot.lane.b32.xlu0 %v1664, 17
        %v1670 = vpop.permute.xlu0 %1669
        %v1671 = vrot.slane %v1668, 4
        %v1672 = vrot.slane %v1670, 4
        %v1673 = vsel %vm449, %v1671, %v1672
        %v1674 = vsel %vm451, %v1668, %v1673
        %1676 = vst [vmem:[#allocation3 + $0xd8] sm:$0xff] %v1674
        %v1677 = vld [vmem:[#allocation2 + $0x30] sm:$0xff]
        %v1678 = vld [vmem:[#allocation2 + $0x38] sm:$0xf]
        %1681 = vrot.lane.b32.xlu0 %v1677, 16
        %v1682 = vpop.permute.xlu0 %1681
        %1683 = vrot.lane.b32.xlu0 %v1678, 16
        %v1684 = vpop.permute.xlu0 %1683
        %v1685 = vrot.slane %v1682, 4
        %v1686 = vrot.slane %v1684, 4
        %v1687 = vsel %vm449, %v1685, %v1686
        %v1688 = vsel %vm466, %v1682, %v1687
        %1690 = vst [vmem:[#allocation3 + $0xe0] sm:$0xff] %v1688
        %v1691 = vld [vmem:[#allocation2 + $0x30] sm:$0xff]
        %v1692 = vld [vmem:[#allocation2 + $0x38] sm:$0xf]
        %v1693 = vunpack.c.l.bf16 %v1691
        %v1694 = vunpack.c.h.bf16 %v1691
        %v1695 = vunpack.c.l.bf16 %v1692
        %v1696 = vmul.f32 %v1693, %v491
        %v1697 = vmul.f32 %v1694, %v495
        %v1698 = vmul.f32 %v1695, %v493
        %v1699 = vpack.c.bf16 %v1697, %v1696
        %v1700 = vpack.c.bf16 %v1698, %v1698
        %1703 = vrot.lane.b32.xlu0 %v1699, 15
        %v1704 = vpop.permute.xlu0 %1703
        %1705 = vrot.lane.b32.xlu0 %v1700, 15
        %v1706 = vpop.permute.xlu0 %1705
        %v1707 = vrot.slane %v1704, 4
        %v1708 = vrot.slane %v1706, 4
        %v1709 = vsel %vm449, %v1707, %v1708
        %v1710 = vsel %vm513, %v1704, %v1709
        %1712 = vst [vmem:[#allocation3 + $0xe8] sm:$0xff] %v1710
        %v1713 = vld [vmem:[#allocation2 + $0x30] sm:$0xff]
        %v1714 = vld [vmem:[#allocation2 + $0x38] sm:$0xf]
        %v1715 = vunpack.c.l.bf16 %v1713
        %v1716 = vunpack.c.h.bf16 %v1713
        %v1717 = vunpack.c.l.bf16 %v1714
        %v1718 = vmul.f32 %v1715, %v523
        %v1719 = vmul.f32 %v1716, %v527
        %v1720 = vmul.f32 %v1717, %v525
        %v1721 = vpack.c.bf16 %v1719, %v1718
        %v1722 = vpack.c.bf16 %v1720, %v1720
        %1725 = vrot.lane.b32.xlu0 %v1721, 1
        %v1726 = vpop.permute.xlu0 %1725
        %1727 = vrot.lane.b32.xlu0 %v1722, 1
        %v1728 = vpop.permute.xlu0 %1727
        %v1729 = vrot.slane %v1726, 4
        %v1730 = vrot.slane %v1728, 4
        %v1731 = vsel %vm449, %v1729, %v1730
        %v1732 = vsel %vm545, %v1726, %v1731
        %1734 = vst [vmem:[#allocation3 + $0xf0] sm:$0xff] %v1732
        %v1735 = vld [vmem:[#allocation2 + $0x34] sm:$0xff]
        %1736 = vst [vmem:[#allocation3 + $0xf8] sm:$0xff] %v1735
        %v1737 = vld [vmem:[#allocation2 + $0x34] sm:$0xff]
        %v1738 = vld [vmem:[#allocation2 + $0x3c] sm:$0xf]
        %v1739 = vunpack.c.l.bf16 %v1737
        %v1740 = vunpack.c.h.bf16 %v1737
        %v1741 = vunpack.c.l.bf16 %v1738
        %v1742 = vmul.f32 %v1739, %v557
        %v1743 = vmul.f32 %v1740, %v561
        %v1744 = vmul.f32 %v1741, %v559
        %v1745 = vpack.c.bf16 %v1743, %v1742
        %v1746 = vpack.c.bf16 %v1744, %v1744
        %1749 = vrot.lane.b32.xlu0 %v1745, 127
        %v1750 = vpop.permute.xlu0 %1749
        %1751 = vrot.lane.b32.xlu0 %v1746, 127
        %v1752 = vpop.permute.xlu0 %1751
        %v1753 = vrot.slane %v1750, 4
        %v1754 = vrot.slane %v1752, 4
        %v1755 = vsel %vm449, %v1753, %v1754
        %v1756 = vsel %vm579, %v1750, %v1755
        %1758 = vst [vmem:[#allocation3 + $0x100] sm:$0xff] %v1756
        %v1759 = vld [vmem:[#allocation2 + $0x34] sm:$0xff]
        %v1760 = vld [vmem:[#allocation2 + $0x3c] sm:$0xf]
        %v1761 = vunpack.c.l.bf16 %v1759
        %v1762 = vunpack.c.h.bf16 %v1759
        %v1763 = vunpack.c.l.bf16 %v1760
        %v1764 = vmul.f32 %v1761, %v589
        %v1765 = vmul.f32 %v1762, %v593
        %v1766 = vmul.f32 %v1763, %v591
        %v1767 = vpack.c.bf16 %v1765, %v1764
        %v1768 = vpack.c.bf16 %v1766, %v1766
        %1771 = vrot.lane.b32.xlu0 %v1767, 113
        %v1772 = vpop.permute.xlu0 %1771
        %1773 = vrot.lane.b32.xlu0 %v1768, 113
        %v1774 = vpop.permute.xlu0 %1773
        %v1775 = vrot.slane %v1772, 4
        %v1776 = vrot.slane %v1774, 4
        %v1777 = vsel %vm449, %v1775, %v1776
        %v1778 = vsel %vm611, %v1772, %v1777
        %1780 = vst [vmem:[#allocation3 + $0x108] sm:$0xff] %v1778
        %v1781 = vld [vmem:[#allocation2 + $0x34] sm:$0xff]
        %v1782 = vld [vmem:[#allocation2 + $0x3c] sm:$0xf]
        %1785 = vrot.lane.b32.xlu0 %v1781, 112
        %v1786 = vpop.permute.xlu0 %1785
        %1787 = vrot.lane.b32.xlu0 %v1782, 112
        %v1788 = vpop.permute.xlu0 %1787
        %v1789 = vrot.slane %v1786, 4
        %v1790 = vrot.slane %v1788, 4
        %v1791 = vsel %vm449, %v1789, %v1790
        %v1792 = vsel %vm626, %v1786, %v1791
        %1794 = vst [vmem:[#allocation3 + $0x110] sm:$0xff] %v1792
        %v1795 = vld [vmem:[#allocation2 + $0x34] sm:$0xff]
        %v1796 = vld [vmem:[#allocation2 + $0x3c] sm:$0xf]
        %v1797 = vunpack.c.l.bf16 %v1795
        %v1798 = vunpack.c.h.bf16 %v1795
        %v1799 = vunpack.c.l.bf16 %v1796
        %v1800 = vmul.f32 %v1797, %v636
        %v1801 = vmul.f32 %v1798, %v640
        %v1802 = vmul.f32 %v1799, %v638
        %v1803 = vpack.c.bf16 %v1801, %v1800
        %v1804 = vpack.c.bf16 %v1802, %v1802
        %1807 = vrot.lane.b32.xlu0 %v1803, 111
        %v1808 = vpop.permute.xlu0 %1807
        %1809 = vrot.lane.b32.xlu0 %v1804, 111
        %v1810 = vpop.permute.xlu0 %1809
        %v1811 = vrot.slane %v1808, 4
        %v1812 = vrot.slane %v1810, 4
        %v1813 = vsel %vm449, %v1811, %v1812
        %v1814 = vsel %vm658, %v1808, %v1813
        %1816 = vst [vmem:[#allocation3 + $0x118] sm:$0xff] %v1814
        %v1817 = vld [vmem:[%s6] sm:$0xf]
        %v1818 = vld [vmem:[#allocation3 + $0xd8] sm:$0xff]
        %v1819 = vld [vmem:[#allocation3 + $0xe0] sm:$0xff]
        %v1820 = vld [vmem:[#allocation3 + $0xe8] sm:$0xff]
        %v1821 = vld [vmem:[#allocation3 + $0xf0] sm:$0xff]
        %v1822 = vld [vmem:[#allocation3 + $0xf8] sm:$0xff]
        %v1823 = vld [vmem:[#allocation3 + $0x100] sm:$0xff]
        %v1824 = vld [vmem:[#allocation3 + $0x108] sm:$0xff]
        %v1825 = vld [vmem:[#allocation3 + $0x110] sm:$0xff]
        %v1826 = vld [vmem:[#allocation3 + $0x118] sm:$0xff]
        %v1836 = vunpack.c.l.b16 %v1818
        %v1837 = vunpack.c.h.b16 %v1818
        %v1838 = vunpack.c.l.b16 %v1819
        %v1839 = vunpack.c.h.b16 %v1819
        %v1840 = vunpack.c.l.b16 %v1820
        %v1841 = vunpack.c.h.b16 %v1820
        %v1842 = vunpack.c.l.b16 %v1821
        %v1843 = vunpack.c.h.b16 %v1821
        %v1844 = vunpack.c.l.b16 %v1822
        %v1845 = vunpack.c.h.b16 %v1822
        %v1846 = vunpack.c.l.b16 %v1823
        %v1847 = vunpack.c.h.b16 %v1823
        %v1848 = vunpack.c.l.b16 %v1824
        %v1849 = vunpack.c.h.b16 %v1824
        %v1850 = vunpack.c.l.b16 %v1825
        %v1851 = vunpack.c.h.b16 %v1825
        %v1852 = vunpack.c.l.b16 %v1826
        %v1853 = vunpack.c.h.b16 %v1826
        %v1854 = vpack.c.b16 %v1838, %v1836
        %v1855 = vpack.c.b16 %v1839, %v1837
        %v1856 = vpack.c.b16 %v1842, %v1840
        %v1857 = vpack.c.b16 %v1843, %v1841
        %v1858 = vpack.c.b16 %v1846, %v1844
        %v1859 = vpack.c.b16 %v1847, %v1845
        %v1860 = vpack.c.b16 %v1850, %v1848
        %v1861 = vpack.c.b16 %v1851, %v1849
        %v1862 = vpack.c.b16 %v1852, %v1852
        %v1863 = vpack.c.b16 %v1853, %v1853
        %v1873 = vsel %vm754, %v1817, 0
        %v1876 = vsel %vm761, %v1862, 0
        %v1879 = vsel %vm761, %v1863, 0
        %1881 = vmatpush.bf16.msra.mxu0 0
        %1882 = vmatpush.bf16.msra.mxu0 0
        %1883 = vmatpush.bf16.msra.mxu0 0
        %1884 = vmatpush.bf16.msra.mxu0 %v1876
        %1885 = vmatpush.bf16.msra.mxu0 %v1860
        %1886 = vmatpush.bf16.msra.mxu0 %v1858
        %1887 = vmatpush.bf16.msra.mxu0 %v1856
        %1888 = vmatpush.bf16.msra.mxu0 %v1854
        %1889 = vmatmul.bf16.gmra.mxu0 %v1873
        %v1890 = vpop.f32.mrf.mxu0
        %v1891 = vadd.f32 0.0, %v1890
        %v1892 = vpop.f32.mrf.mxu0
        %1893 = vdwg.mxu0
        %1894 = vmatpush.bf16.msra.mxu0 0
        %1895 = vmatpush.bf16.msra.mxu0 0
        %1896 = vmatpush.bf16.msra.mxu0 0
        %1897 = vmatpush.bf16.msra.mxu0 %v1879
        %1898 = vmatpush.bf16.msra.mxu0 %v1861
        %1899 = vmatpush.bf16.msra.mxu0 %v1859
        %1900 = vmatpush.bf16.msra.mxu0 %v1857
        %1901 = vmatpush.bf16.msra.mxu0 %v1855
        %1902 = vmatmul.bf16.gmra.mxu0 %v1873
        %v1903 = vpop.f32.mrf.mxu0
        %v1904 = vadd.f32 0.0, %v1903
        %v1905 = vpop.f32.mrf.mxu0
        %1906 = vdwg.mxu0
        %v1907 = vld [vmem:[#allocation4 + $0x30] sm:$0xff]
        %v1908 = vld [vmem:[#allocation4 + $0x38] sm:$0xff]
        %v1909 = vadd.f32 %v1907, %v1891
        %v1910 = vadd.f32 %v1908, %v1904
        %1911 = vst [vmem:[#allocation4 + $0x30] sm:$0xff] %v1909
        %1912 = vst [vmem:[#allocation4 + $0x38] sm:$0xff] %v1910
        %v1913 = vld [vmem:[#allocation4 + $0x30] sm:$0xff]
        %v1914 = vld [vmem:[#allocation4 + $0x38] sm:$0xff]
        %v1915 = vmul.f32 %v1913, 0.5
        %v1916 = vmul.f32 %v1914, 0.5
        %v1917 = vmul.f32 %v1913, 0.70710677
        %v1918 = vmul.f32 %v1914, 0.70710677
        %v1919 = vmul.f32 %v1917, %v1917
        %v1920 = vmin.f32 16.0, %v1919
        %v1921 = vmul.f32 %v1920, 2.1237322e-06
        %v1922 = vadd.f32 %v1921, 0.00028619796
        %v1923 = vmul.f32 %v1920, %v1922
        %v1924 = vadd.f32 %v1923, 0.0036580483
        %v1925 = vmul.f32 %v1920, %v1924
        %v1926 = vadd.f32 %v1925, 0.05243302
        %v1927 = vmul.f32 %v1920, %v1926
        %v1928 = vadd.f32 %v1927, 0.18741608
        %v1929 = vmul.f32 %v1920, %v1928
        %v1930 = vadd.f32 %v1929, 1.1283791
        %v1931 = vmul.f32 %v1917, %v1930
        %v1932 = vmul.f32 %v1920, 3.8918573e-05
        %v1933 = vadd.f32 %v1932, 0.001143296
        %v1934 = vmul.f32 %v1920, %v1933
        %v1935 = vadd.f32 %v1934, 0.014752088
        %v1936 = vmul.f32 %v1920, %v1935
        %v1937 = vadd.f32 %v1936, 0.112945676
        %v1938 = vmul.f32 %v1920, %v1937
        %v1939 = vadd.f32 %v1938, 0.4994258
        %v1940 = vmul.f32 %v1920, %v1939
        %v1941 = vadd.f32 %v1940, 1.0
        %v1942 = vrcp.pop %v1941
        %v1943 = vmul.f32 %v1941, %v1942
        %v1944 = vsub.f32 1.0, %v1943
        %v1945 = vmul.f32 %v1942, %v1944
        %v1946 = vadd.f32 %v1942, %v1945
        %vm1947 = vweird.f32 %v1941
        %vm1948 = vweird.f32 %v1942
        %vm1949 = vmor %vm1947, %vm1948
        %v1950 = vsel %vm1949, %v1942, %v1946
        %v1951 = vand.u32 2147483647, %v1941
        %vm1952 = vcmp.eq.f32.partialorder %v1951, 8.507059e+37
        %v1953 = vand.u32 %v1941, 2147483648
        %v1954 = vor.u32 1.1754944e-38, %v1953
        %v1955 = vsel %vm1952, %v1954, %v1950
        %v1956 = vmul.f32 %v1931, %v1955
        %v1957 = vmin.f32 %v1956, 1.0
        %v1958 = vmax.f32 %v1957, -1.0
        %v1959 = vmul.f32 %v1918, %v1918
        %v1960 = vmin.f32 16.0, %v1959
        %v1961 = vmul.f32 %v1960, 2.1237322e-06
        %v1962 = vadd.f32 %v1961, 0.00028619796
        %v1963 = vmul.f32 %v1960, %v1962
        %v1964 = vadd.f32 %v1963, 0.0036580483
        %v1965 = vmul.f32 %v1960, %v1964
        %v1966 = vadd.f32 %v1965, 0.05243302
        %v1967 = vmul.f32 %v1960, %v1966
        %v1968 = vadd.f32 %v1967, 0.18741608
        %v1969 = vmul.f32 %v1960, %v1968
        %v1970 = vadd.f32 %v1969, 1.1283791
        %v1971 = vmul.f32 %v1918, %v1970
        %v1972 = vmul.f32 %v1960, 3.8918573e-05
        %v1973 = vadd.f32 %v1972, 0.001143296
        %v1974 = vmul.f32 %v1960, %v1973
        %v1975 = vadd.f32 %v1974, 0.014752088
        %v1976 = vmul.f32 %v1960, %v1975
        %v1977 = vadd.f32 %v1976, 0.112945676
        %v1978 = vmul.f32 %v1960, %v1977
        %v1979 = vadd.f32 %v1978, 0.4994258
        %v1980 = vmul.f32 %v1960, %v1979
        %v1981 = vadd.f32 %v1980, 1.0
        %v1982 = vrcp.pop %v1981
        %v1983 = vmul.f32 %v1981, %v1982
        %v1984 = vsub.f32 1.0, %v1983
        %v1985 = vmul.f32 %v1982, %v1984
        %v1986 = vadd.f32 %v1982, %v1985
        %vm1987 = vweird.f32 %v1981
        %vm1988 = vweird.f32 %v1982
        %vm1989 = vmor %vm1987, %vm1988
        %v1990 = vsel %vm1989, %v1982, %v1986
        %v1991 = vand.u32 2147483647, %v1981
        %vm1992 = vcmp.eq.f32.partialorder %v1991, 8.507059e+37
        %v1993 = vand.u32 %v1981, 2147483648
        %v1994 = vor.u32 1.1754944e-38, %v1993
        %v1995 = vsel %vm1992, %v1994, %v1990
        %v1996 = vmul.f32 %v1971, %v1995
        %v1997 = vmin.f32 %v1996, 1.0
        %v1998 = vmax.f32 %v1997, -1.0
        %v1999 = vadd.f32 %v1958, 1.0
        %v2000 = vadd.f32 %v1998, 1.0
        %v2001 = vmul.f32 %v1915, %v1999
        %v2002 = vmul.f32 %v1916, %v2000
        %v2003 = vpack.c.bf16 %v2002, %v2001
        %2004 = vst [vmem:[#allocation2 + $0x44] sm:$0xff] %v2003
        %v2005 = vld [vmem:[#allocation2 + $0x4] sm:$0xff]
        %v2006 = vld [vmem:[#allocation2 + $0x14] sm:$0xff]
        %v2007 = vld [vmem:[#allocation2 + $0x24] sm:$0xff]
        %v2008 = vld [vmem:[#allocation2 + $0x34] sm:$0xff]
        %v2009 = vld [vmem:[#allocation2 + $0x44] sm:$0xff]
        %v2010 = vld [vmem:[#allocation11] sm:$0xf]
        %v2011 = vld [vmem:[%s8] sm:$0xff]
        %2013 = vset.pattern.permute.xlu0 0
        %2014 = vperm.xlu0 %2013, %v2011
        %v2015 = vpop.permute.xlu0 %2014
        %v2022 = vunpack.c.l.b16 %v2005
        %v2023 = vunpack.c.h.b16 %v2005
        %v2024 = vunpack.c.l.b16 %v2006
        %v2025 = vunpack.c.h.b16 %v2006
        %v2026 = vunpack.c.l.b16 %v2007
        %v2027 = vunpack.c.h.b16 %v2007
        %v2028 = vunpack.c.l.b16 %v2008
        %v2029 = vunpack.c.h.b16 %v2008
        %v2030 = vunpack.c.l.b16 %v2009
        %v2031 = vunpack.c.h.b16 %v2009
        %v2032 = vpack.c.b16 %v2024, %v2022
        %v2033 = vpack.c.b16 %v2025, %v2023
        %v2034 = vpack.c.b16 %v2028, %v2026
        %v2035 = vpack.c.b16 %v2029, %v2027
        %v2036 = vpack.c.b16 %v2030, %v2030
        %v2037 = vpack.c.b16 %v2031, %v2031
        %vm2042 = vcmask 326656
        %v2044 = vsel %vm2042, %v2010, 0
        %v2047 = vsel %vm761, %v2036, 0
        %v2050 = vsel %vm761, %v2037, 0
        %2052 = vmatpush.bf16.msra.mxu0 0
        %2053 = vmatpush.bf16.msra.mxu0 0
        %2054 = vmatpush.bf16.msra.mxu0 0
        %2055 = vmatpush.bf16.msra.mxu0 0
        %2056 = vmatpush.bf16.msra.mxu0 0
        %2057 = vmatpush.bf16.msra.mxu0 %v2047
        %2058 = vmatpush.bf16.msra.mxu0 %v2034
        %2059 = vmatpush.bf16.msra.mxu0 %v2032
        %2060 = vmatmul.bf16.gmra.mxu0 %v2044
        %v2061 = vpop.f32.mrf.mxu0
        %v2062 = vadd.f32 %v2015, %v2061
        %v2063 = vpop.f32.mrf.mxu0
        %2064 = vdwg.mxu0
        %2065 = vmatpush.bf16.msra.mxu0 0
        %2066 = vmatpush.bf16.msra.mxu0 0
        %2067 = vmatpush.bf16.msra.mxu0 0
        %2068 = vmatpush.bf16.msra.mxu0 0
        %2069 = vmatpush.bf16.msra.mxu0 0
        %2070 = vmatpush.bf16.msra.mxu0 %v2050
        %2071 = vmatpush.bf16.msra.mxu0 %v2035
        %2072 = vmatpush.bf16.msra.mxu0 %v2033
        %2073 = vmatmul.bf16.gmra.mxu0 %v2044
        %v2074 = vpop.f32.mrf.mxu0
        %v2075 = vadd.f32 %v2015, %v2074
        %v2076 = vpop.f32.mrf.mxu0
        %2077 = vdwg.mxu0
        %v2078 = vadd.f32 %v2062, %v403
        %v2079 = vadd.f32 %v2075, %v404
        %2080 = vst [vmem:[%s388] sm:$0xff] %v2078
        %2081 = vst [vmem:[%s388 + $0x8] sm:$0xff] %v2079
        %s2082 = sand.u32 %s228, 1
        %s2083 = scalar_lea.sflag [#allocation7], %s2082
        %s2084 = sand.u32 %s228, 1
        %s2085 = smul.addr %s2084, 16
        %s2086 = scalar_lea.vmem [#allocation13], %s2085
        // Predicated region
        $region73: #{tpu_custom_call.1} parent=55 // pred_check
          %p2087 = pneg %p238
        $region74: #{tpu_custom_call.1} parent=55 // pred_check_branch
          %2089 = sbr.rel (%p2087) target = $region76
        $region75: #{tpu_custom_call.1} parent=55 // pred_region
          %2091 = vsyncadd %s2083, 0
          %s2092 = smul.addr %s26, 2
          %s2093 = smul.addr %s2092, 8
          %s2094 = scalar_lea.hbm %s9, %s2093
          %s2096 = sshll.u32 %s2086, 4
          %s2097 = int_to_ptr.vmem [resolvable:$true] %s2096
          %s2098 = sshll.u32 %s2094, 4
          %s2099 = int_to_ptr.hbm [resolvable:$true] %s2098
          %2101 = dma.vmem_to_hbm [thread:$0]  %s2097, 256, %s2099, %s2083
        $region76: #{tpu_custom_call.1} parent=55 // pred_fallthru
          _
      $region56: #{tpu_custom_call.1} parent=5 // pred_fallthru
        _
      %p2102 = scmp.le.s32.totalorder 2, %s21
      // Predicated region
      $region77: #{tpu_custom_call.1} parent=5 // pred_check
        %p2103 = pneg %p2102
      $region78: #{tpu_custom_call.1} parent=5 // pred_check_branch
        %2105 = sbr.rel (%p2103) target = $region80
      $region79: #{tpu_custom_call.1} parent=5 // pred_region
        %s2106 = ssub.s32 %s21, 2
        // Predicated region
        $region81: #{tpu_custom_call.1} parent=79 // pred_check
          %p2107 = pneg %p244
        $region82: #{tpu_custom_call.1} parent=79 // pred_check_branch
          %2109 = sbr.rel (%p2107) target = $region84
        $region83: #{tpu_custom_call.1} parent=79 // pred_region
          %s2110 = sand.u32 %s229, 1
          %s2111 = scalar_lea.sflag [#allocation7], %s2110
          %s2112 = sand.u32 %s229, 1
          %s2113 = smul.addr %s2112, 16
          %s2114 = scalar_lea.vmem [#allocation13], %s2113
          %2116 = dma.done %s2111, 256
        $region84: #{tpu_custom_call.1} parent=79 // pred_fallthru
          _
      $region80: #{tpu_custom_call.1} parent=5 // pred_fallthru
        _
    $region6: #{tpu_custom_call.1} parent=1 // loop_footer
      %s25 = sadd.s32 1, %s21
    $region7: #{tpu_custom_call.1} parent=1 // loop_footer_branch
      %20 = sbr.rel target = $region3
    $region8: #{tpu_custom_call.1} parent=1 // loop_exit
      _
    %2117 = vsyncpa [#allocation6], 1
    %s2118 = scalar_lea.sflag [#allocation6], 1
    %2119 = vsyncpa %s2118, 1
    %2120 = vsyncpa [#allocation9], 1
    %2121 = vsyncpa [#allocation12], 1
    %2122 = vsyncpa [#allocation7], 1
    %s2123 = scalar_lea.sflag [#allocation7], 1
    %2124 = vsyncpa %s2123, 1

</llo_original>
